<compile_context>
chip_gen: v6e
topology: v6e:2x2x1
jax: 0.10.0
libtpu: 0.0.40
codegen_flags: <defaults>
</compile_context>

<pallas_src>
import functools
import math

import jax
import jax.numpy as jnp
from jax.experimental import pallas as pl
from jax.experimental.pallas import tpu as pltpu

# ---------------- model hyper-parameters (small, consistent with the module) --
VOCAB_SIZE = 50
EMBED_SIZE = 48             # args.embed_size (divisible by 3)
EACH_OUT = EMBED_SIZE // 3  # 16 = Conv1d out_channels per kernel size
OUT3 = 3 * EACH_OUT         # 48 = concatenated pooled feature size
HIDDEN_SIZE = 32
NUM_CLASSES = 4
BATCH = 2
SEQ = 8
KERNEL_SIZES = (3, 4, 5)
MAX_PAD = 2                 # left/right zero-pad for the widest kernel (k=5)
WIN = 2 * MAX_PAD + 1       # 5 taps per output position

# lane-dense padded sizes (host-side zero padding; all logical dims <= 128)
LANE = 128
VPAD = LANE                 # vocab rows
EPAD = LANE                 # embedding columns / conv contraction dim
OPAD = LANE                 # 3*O conv output columns
HPAD = LANE                 # hidden
CPAD = LANE                 # classes

ROWS_PER_TILE = 256         # target (batch_tile * seq) rows per grid step


def cnn_classifier_kernel(ids_ref, embed_ref, wblk_ref, w1_ref, b1_ref,
                          w2_ref, b2_ref, out_ref, *, seq):
    """ids_ref: [bt*seq, 1] int32 token ids for this batch tile.
    embed_ref: [VPAD, EPAD] zero-padded embedding table.
    wblk_ref: [WIN, EPAD, OPAD] per-tap block conv weights (all three convs).
    w1_ref: [OPAD, HPAD], b1_ref: [1, HPAD], w2_ref: [HPAD, CPAD],
    b2_ref: [1, CPAD].  out_ref: [bt, CPAD] lane-dense logits tile."""
    rows = ids_ref.shape[0]                     # bt * seq
    bt = rows // seq
    vpad = embed_ref.shape[0]
    inv_sqrt2 = 1.0 / math.sqrt(2.0)

    # ---- 1) fused embedding gather: lane-dense one-hot MXU matmul -------------
    ids = ids_ref[...]                                               # (rows, 1)
    vocab_iota = jax.lax.broadcasted_iota(jnp.int32, (rows, vpad), 1)
    onehot = (vocab_iota == ids).astype(jnp.float32)                 # (rows, VPAD)
    emb = jnp.dot(onehot, embed_ref[...],
                  preferred_element_type=jnp.float32)                # (rows, EPAD)

    # ---- 2) three 'same'-padded convs as WIN accumulated tap matmuls ----------
    # Tap j needs the input shifted by d = j - MAX_PAD (zero outside [0, seq)).
    # The shift is an exact 0/1 selection matrix built from iotas — no scratch,
    # no masked stores, shift+tap are two MXU passes each (MXU is idle anyway).
    r = jax.lax.broadcasted_iota(jnp.int32, (rows, rows), 0)         # out row
    c = jax.lax.broadcasted_iota(jnp.int32, (rows, rows), 1)         # src row
    s_in_seq = r % seq
    conv = jnp.zeros((rows, wblk_ref.shape[2]), jnp.float32)         # (rows, OPAD)
    for j in range(WIN):
        d = j - MAX_PAD
        valid = jnp.logical_and(s_in_seq + d >= 0, s_in_seq + d < seq)
        sel = jnp.logical_and(valid, c == r + d).astype(jnp.float32)
        xj = jnp.dot(sel, emb, preferred_element_type=jnp.float32)   # shifted emb
        conv = conv + jnp.dot(xj, wblk_ref[j],
                              preferred_element_type=jnp.float32)

    # ---- 3) max-over-time per example -----------------------------------------
    feat = jnp.max(conv.reshape(bt, seq, conv.shape[-1]), axis=1)    # (bt, OPAD)

    # ---- 4) classifier: Linear -> Dropout(identity, eval) -> GELU(exact) -> Linear
    h = jnp.dot(feat, w1_ref[...],
                preferred_element_type=jnp.float32) + b1_ref[...]    # (bt, HPAD)
    h = 0.5 * h * (1.0 + jax.lax.erf(h * inv_sqrt2))                 # exact GELU
    logits = jnp.dot(h, w2_ref[...],
                     preferred_element_type=jnp.float32) + b2_ref[...]
    out_ref[...] = logits.astype(out_ref.dtype)                      # (bt, CPAD)


@jax.jit
def classification_forward(input_ids, pp):
    """input_ids: int32 [B, S].  pp: lane-padded parameters.
    Returns logits [B, NUM_CLASSES].  (attention_mask / token_type_ids are
    unused by the CNN branch of the original module.)"""
    B, S = input_ids.shape

    # batch tiling: ~ROWS_PER_TILE rows per grid step; multiple-of-8 tiles when
    # gridding so all block shapes stay (8,128)-legal.
    bt = min(B, max(1, ROWS_PER_TILE // S))
    if bt < B:
        bt = max(8, (bt // 8) * 8)
    nb = (B + bt - 1) // bt
    b_pad = nb * bt
    if b_pad != B:
        pad = jnp.zeros((b_pad - B, S), input_ids.dtype)
        input_ids = jnp.concatenate([input_ids, pad], axis=0)
    ids = input_ids.reshape(b_pad * S, 1).astype(jnp.int32)

    kernel = pl.pallas_call(
        functools.partial(cnn_classifier_kernel, seq=S),
        out_shape=jax.ShapeDtypeStruct((b_pad, CPAD), jnp.float32),
        grid=(nb,),
        in_specs=[
            pl.BlockSpec((bt * S, 1), lambda b: (b, 0)),            # token ids
            pl.BlockSpec((VPAD, EPAD), lambda b: (0, 0)),           # embed (resident)
            pl.BlockSpec((WIN, EPAD, OPAD), lambda b: (0, 0, 0)),   # conv block (resident)
            pl.BlockSpec((OPAD, HPAD), lambda b: (0, 0)),           # w1 (resident)
            pl.BlockSpec((1, HPAD), lambda b: (0, 0)),              # b1
            pl.BlockSpec((HPAD, CPAD), lambda b: (0, 0)),           # w2 (resident)
            pl.BlockSpec((1, CPAD), lambda b: (0, 0)),              # b2
        ],
        out_specs=pl.BlockSpec((bt, CPAD), lambda b: (b, 0)),       # lane-dense out
        compiler_params=pltpu.CompilerParams(
            dimension_semantics=("parallel",),       # shard batch tiles on v7x's 2 TCs
            vmem_limit_bytes=32 * 1024 * 1024,       # safe on v5e/v6e/v7x
        ),
    )
    logits = kernel(ids, pp["embed"], pp["w_conv"], pp["w1"], pp["b1"],
                    pp["w2"], pp["b2"])
    return logits[:B, :NUM_CLASSES]


def init_params(key):
    ks = jax.random.split(key, 9)
    params = {}
    params["embed"] = jax.random.normal(ks[0], (VOCAB_SIZE, EMBED_SIZE),
                                        jnp.float32)
    # Conv1d weights [O, E, k] (PyTorch layout) -> stored as [k, E, O].
    for i, k in enumerate(KERNEL_SIZES):
        bound = 1.0 / math.sqrt(EMBED_SIZE * k)
        w = jax.random.uniform(ks[1 + i], (EACH_OUT, EMBED_SIZE, k),
                               jnp.float32, -bound, bound)
        params[f"conv{k}"] = jnp.transpose(w, (2, 1, 0))             # [k, E, O]
    bound = 1.0 / math.sqrt(OUT3)
    params["w1"] = jax.random.uniform(ks[4], (OUT3, HIDDEN_SIZE),
                                      jnp.float32, -bound, bound)
    params["b1"] = jax.random.uniform(ks[5], (1, HIDDEN_SIZE),
                                      jnp.float32, -bound, bound)
    bound = 1.0 / math.sqrt(HIDDEN_SIZE)
    params["w2"] = jax.random.uniform(ks[6], (HIDDEN_SIZE, NUM_CLASSES),
                                      jnp.float32, -bound, bound)
    params["b2"] = jax.random.uniform(ks[7], (1, NUM_CLASSES),
                                      jnp.float32, -bound, bound)
    return params


def make_padded_params(params):
    """Zero-pad every operand to lane-dense (128-wide) shapes so all kernel
    matmuls / the output store are unmasked full-lane tiles.  Also stacks the
    three conv weights into a per-tap block weight w_conv[j] (E, 3*O):
    tap t of a kernel-size-k conv (PyTorch 'same', left pad = (k-1)//2) lands
    at tap index j = MAX_PAD - (k-1)//2 + t and that conv's column block."""
    embed = jnp.zeros((VPAD, EPAD), jnp.float32)
    embed = embed.at[:VOCAB_SIZE, :EMBED_SIZE].set(params["embed"])
    w_conv = jnp.zeros((WIN, EPAD, OPAD), jnp.float32)
    col = 0
    for k in KERNEL_SIZES:
        left = (k - 1) // 2
        base = MAX_PAD - left
        w_keo = params[f"conv{k}"]                                   # [k, E, O]
        for t in range(k):
            w_conv = w_conv.at[base + t, :EMBED_SIZE,
                               col:col + EACH_OUT].set(w_keo[t])
        col += EACH_OUT
    w1 = jnp.zeros((OPAD, HPAD), jnp.float32).at[:OUT3, :HIDDEN_SIZE].set(params["w1"])
    b1 = jnp.zeros((1, HPAD), jnp.float32).at[:, :HIDDEN_SIZE].set(params["b1"])
    w2 = jnp.zeros((HPAD, CPAD), jnp.float32).at[:HIDDEN_SIZE, :NUM_CLASSES].set(params["w2"])
    b2 = jnp.zeros((1, CPAD), jnp.float32).at[:, :NUM_CLASSES].set(params["b2"])
    return {"embed": embed, "w_conv": w_conv, "w1": w1, "b1": b1,
            "w2": w2, "b2": b2}


def reference_forward(input_ids, params):
    """Plain-JAX reference mirroring the PyTorch forward (eval mode)."""
    x = jnp.take(params["embed"], input_ids, axis=0)                 # [B, S, E]
    x_pad = jnp.pad(x, ((0, 0), (MAX_PAD, MAX_PAD), (0, 0)))
    S = input_ids.shape[1]
    pooled = []
    for k in KERNEL_SIZES:
        left = (k - 1) // 2
        base = MAX_PAD - left
        w = params[f"conv{k}"]                                       # [k, E, O]
        acc = sum(jnp.einsum("bse,eo->bso",
                             x_pad[:, base + j: base + j + S, :], w[j])
                  for j in range(k))
        pooled.append(jnp.max(acc, axis=1))                          # [B, O]
    feat = jnp.concatenate(pooled, axis=-1)
    h = feat @ params["w1"] + params["b1"]
    h = 0.5 * h * (1.0 + jax.lax.erf(h / math.sqrt(2.0)))
    return h @ params["w2"] + params["b2"]


if __name__ == "__main__":
    key = jax.random.PRNGKey(0)
    pkey, dkey = jax.random.split(key)
    params = init_params(pkey)
    pp = make_padded_params(params)

    # Forward signature in the module is (input_ids, attention_mask,
    # token_type_ids); the CNN branch uses only input_ids.
    input_ids = jax.random.randint(dkey, (BATCH, SEQ), 0, VOCAB_SIZE, jnp.int32)

    logits = classification_forward(input_ids, pp)
    logits = jax.block_until_ready(logits)

    ref = reference_forward(input_ids, params)
    assert logits.shape == (BATCH, NUM_CLASSES)
    assert jnp.allclose(logits, ref, atol=1e-4, rtol=1e-4), "mismatch vs reference"

    print("KERNEL_OK")
</pallas_src>

<mosaic_0001>
module attributes {stable_mosaic.version = 11 : i64} {
  func.func @cnn_classifier_kernel(%arg0: i32, %arg1: memref<16x1xi32, #tpu.memory_space<vmem>>, %arg2: memref<128x128xf32, #tpu.memory_space<vmem>>, %arg3: memref<5x128x128xf32, #tpu.memory_space<vmem>>, %arg4: memref<128x128xf32, #tpu.memory_space<vmem>>, %arg5: memref<1x128xf32, #tpu.memory_space<vmem>>, %arg6: memref<128x128xf32, #tpu.memory_space<vmem>>, %arg7: memref<1x128xf32, #tpu.memory_space<vmem>>, %arg8: memref<2x128xf32, #tpu.memory_space<vmem>>) attributes {dimension_semantics = [#tpu.dimension_semantics<parallel>], iteration_bounds = array<i64: 1>, scalar_prefetch = 0 : i64, scratch_operands = 0 : i64, tpu.core_type = #tpu.core_type<tc>, window_params = [{transform_indices = @transform_0, window_bounds = array<i64: 16, 1>}, {pipeline_mode = #tpu.pipeline_mode<synchronous>, transform_indices = @transform_1, window_bounds = array<i64: 128, 128>}, {pipeline_mode = #tpu.pipeline_mode<synchronous>, transform_indices = @transform_2, window_bounds = array<i64: 5, 128, 128>}, {pipeline_mode = #tpu.pipeline_mode<synchronous>, transform_indices = @transform_3, window_bounds = array<i64: 128, 128>}, {pipeline_mode = #tpu.pipeline_mode<synchronous>, transform_indices = @transform_4, window_bounds = array<i64: 1, 128>}, {pipeline_mode = #tpu.pipeline_mode<synchronous>, transform_indices = @transform_5, window_bounds = array<i64: 128, 128>}, {pipeline_mode = #tpu.pipeline_mode<synchronous>, transform_indices = @transform_6, window_bounds = array<i64: 1, 128>}, {transform_indices = @transform_7, window_bounds = array<i64: 2, 128>}]} {
    %c0 = arith.constant 0 : index
    %c0_0 = arith.constant 0 : index
    %0 = vector.load %arg1[%c0, %c0_0] : memref<16x1xi32, #tpu.memory_space<vmem>>, vector<16x1xi32>
    %1 = tpu.iota {dimensions = array<i32: 1>} : vector<16x128xi32>
    %2 = vector.broadcast %0 : vector<16x1xi32> to vector<16x128xi32>
    %3 = arith.cmpi eq, %1, %2 : vector<16x128xi32>
    %4 = arith.extui %3 : vector<16x128xi1> to vector<16x128xi32>
    %5 = arith.sitofp %4 : vector<16x128xi32> to vector<16x128xf32>
    %c0_1 = arith.constant 0 : index
    %c0_2 = arith.constant 0 : index
    %6 = vector.load %arg2[%c0_1, %c0_2] : memref<128x128xf32, #tpu.memory_space<vmem>>, vector<128x128xf32>
    %cst = arith.constant dense<0.000000e+00> : vector<16x128xf32>
    %7 = tpu.matmul %5, %6, %cst {dimension_numbers = #tpu.dot_dimension_numbers<[1], [0], [0], [1], [0, 0, 1, 1], [], []>} : vector<16x128xf32>, vector<128x128xf32>, vector<16x128xf32> -> vector<16x128xf32>
    %8 = tpu.iota {dimensions = array<i32: 0>} : vector<16x16xi32>
    %9 = tpu.iota {dimensions = array<i32: 1>} : vector<16x16xi32>
    %c8_i32 = arith.constant 8 : i32
    %c0_i32 = arith.constant 0 : i32
    %10 = arith.cmpi eq, %c8_i32, %c0_i32 : i32
    %c1_i32 = arith.constant 1 : i32
    %11 = arith.select %10, %c1_i32, %c8_i32 : i32
    %12 = vector.broadcast %11 : i32 to vector<16x16xi32>
    %13 = arith.remsi %8, %12 : vector<16x16xi32>
    %c0_i32_3 = arith.constant 0 : i32
    %14 = vector.broadcast %c0_i32_3 : i32 to vector<16x16xi32>
    %15 = arith.cmpi ne, %13, %14 : vector<16x16xi32>
    %c0_i32_4 = arith.constant 0 : i32
    %16 = vector.broadcast %c0_i32_4 : i32 to vector<16x16xi32>
    %17 = arith.cmpi slt, %13, %16 : vector<16x16xi32>
    %c0_i32_5 = arith.constant 0 : i32
    %18 = arith.cmpi slt, %11, %c0_i32_5 : i32
    %19 = vector.broadcast %18 : i1 to vector<16x16xi1>
    %20 = vector.broadcast %19 : vector<16x16xi1> to vector<16x16xi1>
    %21 = arith.xori %17, %20 : vector<16x16xi1>
    %22 = arith.andi %21, %15 : vector<16x16xi1>
    %23 = vector.broadcast %11 : i32 to vector<16x16xi32>
    %24 = arith.addi %13, %23 : vector<16x16xi32>
    %25 = arith.select %22, %24, %13 : vector<16x16xi1>, vector<16x16xi32>
    %cst_6 = arith.constant 0.000000e+00 : f32
    %26 = vector.broadcast %cst_6 : f32 to vector<16x128xf32>
    %c-2_i32 = arith.constant -2 : i32
    %27 = vector.broadcast %c-2_i32 : i32 to vector<16x16xi32>
    %28 = arith.addi %25, %27 : vector<16x16xi32>
    %c0_i32_7 = arith.constant 0 : i32
    %29 = vector.broadcast %c0_i32_7 : i32 to vector<16x16xi32>
    %30 = arith.cmpi sge, %28, %29 : vector<16x16xi32>
    %c-2_i32_8 = arith.constant -2 : i32
    %31 = vector.broadcast %c-2_i32_8 : i32 to vector<16x16xi32>
    %32 = arith.addi %25, %31 : vector<16x16xi32>
    %c8_i32_9 = arith.constant 8 : i32
    %33 = vector.broadcast %c8_i32_9 : i32 to vector<16x16xi32>
    %34 = arith.cmpi slt, %32, %33 : vector<16x16xi32>
    %35 = arith.andi %30, %34 : vector<16x16xi1>
    %c-2_i32_10 = arith.constant -2 : i32
    %36 = vector.broadcast %c-2_i32_10 : i32 to vector<16x16xi32>
    %37 = arith.addi %8, %36 : vector<16x16xi32>
    %38 = arith.cmpi eq, %9, %37 : vector<16x16xi32>
    %39 = arith.andi %35, %38 : vector<16x16xi1>
    %40 = arith.extui %39 : vector<16x16xi1> to vector<16x16xi32>
    %41 = arith.sitofp %40 : vector<16x16xi32> to vector<16x16xf32>
    %cst_11 = arith.constant dense<0.000000e+00> : vector<16x128xf32>
    %42 = tpu.matmul %41, %7, %cst_11 {dimension_numbers = #tpu.dot_dimension_numbers<[1], [0], [0], [1], [0, 0, 1, 1], [], []>} : vector<16x16xf32>, vector<16x128xf32>, vector<16x128xf32> -> vector<16x128xf32>
    %c0_12 = arith.constant 0 : index
    %c0_13 = arith.constant 0 : index
    %c0_14 = arith.constant 0 : index
    %43 = vector.load %arg3[%c0_12, %c0_13, %c0_14] : memref<5x128x128xf32, #tpu.memory_space<vmem>>, vector<1x128x128xf32>
    %44 = vector.shape_cast %43 : vector<1x128x128xf32> to vector<128x128xf32>
    %cst_15 = arith.constant dense<0.000000e+00> : vector<16x128xf32>
    %45 = tpu.matmul %42, %44, %cst_15 {dimension_numbers = #tpu.dot_dimension_numbers<[1], [0], [0], [1], [0, 0, 1, 1], [], []>} : vector<16x128xf32>, vector<128x128xf32>, vector<16x128xf32> -> vector<16x128xf32>
    %46 = arith.addf %26, %45 : vector<16x128xf32>
    %c-1_i32 = arith.constant -1 : i32
    %47 = vector.broadcast %c-1_i32 : i32 to vector<16x16xi32>
    %48 = arith.addi %25, %47 : vector<16x16xi32>
    %c0_i32_16 = arith.constant 0 : i32
    %49 = vector.broadcast %c0_i32_16 : i32 to vector<16x16xi32>
    %50 = arith.cmpi sge, %48, %49 : vector<16x16xi32>
    %c-1_i32_17 = arith.constant -1 : i32
    %51 = vector.broadcast %c-1_i32_17 : i32 to vector<16x16xi32>
    %52 = arith.addi %25, %51 : vector<16x16xi32>
    %c8_i32_18 = arith.constant 8 : i32
    %53 = vector.broadcast %c8_i32_18 : i32 to vector<16x16xi32>
    %54 = arith.cmpi slt, %52, %53 : vector<16x16xi32>
    %55 = arith.andi %50, %54 : vector<16x16xi1>
    %c-1_i32_19 = arith.constant -1 : i32
    %56 = vector.broadcast %c-1_i32_19 : i32 to vector<16x16xi32>
    %57 = arith.addi %8, %56 : vector<16x16xi32>
    %58 = arith.cmpi eq, %9, %57 : vector<16x16xi32>
    %59 = arith.andi %55, %58 : vector<16x16xi1>
    %60 = arith.extui %59 : vector<16x16xi1> to vector<16x16xi32>
    %61 = arith.sitofp %60 : vector<16x16xi32> to vector<16x16xf32>
    %cst_20 = arith.constant dense<0.000000e+00> : vector<16x128xf32>
    %62 = tpu.matmul %61, %7, %cst_20 {dimension_numbers = #tpu.dot_dimension_numbers<[1], [0], [0], [1], [0, 0, 1, 1], [], []>} : vector<16x16xf32>, vector<16x128xf32>, vector<16x128xf32> -> vector<16x128xf32>
    %c1 = arith.constant 1 : index
    %c0_21 = arith.constant 0 : index
    %c0_22 = arith.constant 0 : index
    %63 = vector.load %arg3[%c1, %c0_21, %c0_22] : memref<5x128x128xf32, #tpu.memory_space<vmem>>, vector<1x128x128xf32>
    %64 = vector.shape_cast %63 : vector<1x128x128xf32> to vector<128x128xf32>
    %cst_23 = arith.constant dense<0.000000e+00> : vector<16x128xf32>
    %65 = tpu.matmul %62, %64, %cst_23 {dimension_numbers = #tpu.dot_dimension_numbers<[1], [0], [0], [1], [0, 0, 1, 1], [], []>} : vector<16x128xf32>, vector<128x128xf32>, vector<16x128xf32> -> vector<16x128xf32>
    %66 = arith.addf %46, %65 : vector<16x128xf32>
    %c0_i32_24 = arith.constant 0 : i32
    %67 = vector.broadcast %c0_i32_24 : i32 to vector<16x16xi32>
    %68 = arith.addi %25, %67 : vector<16x16xi32>
    %c0_i32_25 = arith.constant 0 : i32
    %69 = vector.broadcast %c0_i32_25 : i32 to vector<16x16xi32>
    %70 = arith.cmpi sge, %68, %69 : vector<16x16xi32>
    %c0_i32_26 = arith.constant 0 : i32
    %71 = vector.broadcast %c0_i32_26 : i32 to vector<16x16xi32>
    %72 = arith.addi %25, %71 : vector<16x16xi32>
    %c8_i32_27 = arith.constant 8 : i32
    %73 = vector.broadcast %c8_i32_27 : i32 to vector<16x16xi32>
    %74 = arith.cmpi slt, %72, %73 : vector<16x16xi32>
    %75 = arith.andi %70, %74 : vector<16x16xi1>
    %c0_i32_28 = arith.constant 0 : i32
    %76 = vector.broadcast %c0_i32_28 : i32 to vector<16x16xi32>
    %77 = arith.addi %8, %76 : vector<16x16xi32>
    %78 = arith.cmpi eq, %9, %77 : vector<16x16xi32>
    %79 = arith.andi %75, %78 : vector<16x16xi1>
    %80 = arith.extui %79 : vector<16x16xi1> to vector<16x16xi32>
    %81 = arith.sitofp %80 : vector<16x16xi32> to vector<16x16xf32>
    %cst_29 = arith.constant dense<0.000000e+00> : vector<16x128xf32>
    %82 = tpu.matmul %81, %7, %cst_29 {dimension_numbers = #tpu.dot_dimension_numbers<[1], [0], [0], [1], [0, 0, 1, 1], [], []>} : vector<16x16xf32>, vector<16x128xf32>, vector<16x128xf32> -> vector<16x128xf32>
    %c2 = arith.constant 2 : index
    %c0_30 = arith.constant 0 : index
    %c0_31 = arith.constant 0 : index
    %83 = vector.load %arg3[%c2, %c0_30, %c0_31] : memref<5x128x128xf32, #tpu.memory_space<vmem>>, vector<1x128x128xf32>
    %84 = vector.shape_cast %83 : vector<1x128x128xf32> to vector<128x128xf32>
    %cst_32 = arith.constant dense<0.000000e+00> : vector<16x128xf32>
    %85 = tpu.matmul %82, %84, %cst_32 {dimension_numbers = #tpu.dot_dimension_numbers<[1], [0], [0], [1], [0, 0, 1, 1], [], []>} : vector<16x128xf32>, vector<128x128xf32>, vector<16x128xf32> -> vector<16x128xf32>
    %86 = arith.addf %66, %85 : vector<16x128xf32>
    %c1_i32_33 = arith.constant 1 : i32
    %87 = vector.broadcast %c1_i32_33 : i32 to vector<16x16xi32>
    %88 = arith.addi %25, %87 : vector<16x16xi32>
    %c0_i32_34 = arith.constant 0 : i32
    %89 = vector.broadcast %c0_i32_34 : i32 to vector<16x16xi32>
    %90 = arith.cmpi sge, %88, %89 : vector<16x16xi32>
    %c1_i32_35 = arith.constant 1 : i32
    %91 = vector.broadcast %c1_i32_35 : i32 to vector<16x16xi32>
    %92 = arith.addi %25, %91 : vector<16x16xi32>
    %c8_i32_36 = arith.constant 8 : i32
    %93 = vector.broadcast %c8_i32_36 : i32 to vector<16x16xi32>
    %94 = arith.cmpi slt, %92, %93 : vector<16x16xi32>
    %95 = arith.andi %90, %94 : vector<16x16xi1>
    %c1_i32_37 = arith.constant 1 : i32
    %96 = vector.broadcast %c1_i32_37 : i32 to vector<16x16xi32>
    %97 = arith.addi %8, %96 : vector<16x16xi32>
    %98 = arith.cmpi eq, %9, %97 : vector<16x16xi32>
    %99 = arith.andi %95, %98 : vector<16x16xi1>
    %100 = arith.extui %99 : vector<16x16xi1> to vector<16x16xi32>
    %101 = arith.sitofp %100 : vector<16x16xi32> to vector<16x16xf32>
    %cst_38 = arith.constant dense<0.000000e+00> : vector<16x128xf32>
    %102 = tpu.matmul %101, %7, %cst_38 {dimension_numbers = #tpu.dot_dimension_numbers<[1], [0], [0], [1], [0, 0, 1, 1], [], []>} : vector<16x16xf32>, vector<16x128xf32>, vector<16x128xf32> -> vector<16x128xf32>
    %c3 = arith.constant 3 : index
    %c0_39 = arith.constant 0 : index
    %c0_40 = arith.constant 0 : index
    %103 = vector.load %arg3[%c3, %c0_39, %c0_40] : memref<5x128x128xf32, #tpu.memory_space<vmem>>, vector<1x128x128xf32>
    %104 = vector.shape_cast %103 : vector<1x128x128xf32> to vector<128x128xf32>
    %cst_41 = arith.constant dense<0.000000e+00> : vector<16x128xf32>
    %105 = tpu.matmul %102, %104, %cst_41 {dimension_numbers = #tpu.dot_dimension_numbers<[1], [0], [0], [1], [0, 0, 1, 1], [], []>} : vector<16x128xf32>, vector<128x128xf32>, vector<16x128xf32> -> vector<16x128xf32>
    %106 = arith.addf %86, %105 : vector<16x128xf32>
    %c2_i32 = arith.constant 2 : i32
    %107 = vector.broadcast %c2_i32 : i32 to vector<16x16xi32>
    %108 = arith.addi %25, %107 : vector<16x16xi32>
    %c0_i32_42 = arith.constant 0 : i32
    %109 = vector.broadcast %c0_i32_42 : i32 to vector<16x16xi32>
    %110 = arith.cmpi sge, %108, %109 : vector<16x16xi32>
    %c2_i32_43 = arith.constant 2 : i32
    %111 = vector.broadcast %c2_i32_43 : i32 to vector<16x16xi32>
    %112 = arith.addi %25, %111 : vector<16x16xi32>
    %c8_i32_44 = arith.constant 8 : i32
    %113 = vector.broadcast %c8_i32_44 : i32 to vector<16x16xi32>
    %114 = arith.cmpi slt, %112, %113 : vector<16x16xi32>
    %115 = arith.andi %110, %114 : vector<16x16xi1>
    %c2_i32_45 = arith.constant 2 : i32
    %116 = vector.broadcast %c2_i32_45 : i32 to vector<16x16xi32>
    %117 = arith.addi %8, %116 : vector<16x16xi32>
    %118 = arith.cmpi eq, %9, %117 : vector<16x16xi32>
    %119 = arith.andi %115, %118 : vector<16x16xi1>
    %120 = arith.extui %119 : vector<16x16xi1> to vector<16x16xi32>
    %121 = arith.sitofp %120 : vector<16x16xi32> to vector<16x16xf32>
    %cst_46 = arith.constant dense<0.000000e+00> : vector<16x128xf32>
    %122 = tpu.matmul %121, %7, %cst_46 {dimension_numbers = #tpu.dot_dimension_numbers<[1], [0], [0], [1], [0, 0, 1, 1], [], []>} : vector<16x16xf32>, vector<16x128xf32>, vector<16x128xf32> -> vector<16x128xf32>
    %c4 = arith.constant 4 : index
    %c0_47 = arith.constant 0 : index
    %c0_48 = arith.constant 0 : index
    %123 = vector.load %arg3[%c4, %c0_47, %c0_48] : memref<5x128x128xf32, #tpu.memory_space<vmem>>, vector<1x128x128xf32>
    %124 = vector.shape_cast %123 : vector<1x128x128xf32> to vector<128x128xf32>
    %cst_49 = arith.constant dense<0.000000e+00> : vector<16x128xf32>
    %125 = tpu.matmul %122, %124, %cst_49 {dimension_numbers = #tpu.dot_dimension_numbers<[1], [0], [0], [1], [0, 0, 1, 1], [], []>} : vector<16x128xf32>, vector<128x128xf32>, vector<16x128xf32> -> vector<16x128xf32>
    %126 = arith.addf %106, %125 : vector<16x128xf32>
    %127 = vector.shape_cast %126 : vector<16x128xf32> to vector<2x8x128xf32>
    %cst_50 = arith.constant dense<0xFF800000> : vector<2x128xf32>
    %128 = vector.multi_reduction <maximumf>, %127, %cst_50 [1] : vector<2x8x128xf32> to vector<2x128xf32>
    %c0_51 = arith.constant 0 : index
    %c0_52 = arith.constant 0 : index
    %129 = vector.load %arg4[%c0_51, %c0_52] : memref<128x128xf32, #tpu.memory_space<vmem>>, vector<128x128xf32>
    %cst_53 = arith.constant dense<0.000000e+00> : vector<2x128xf32>
    %130 = tpu.matmul %128, %129, %cst_53 {dimension_numbers = #tpu.dot_dimension_numbers<[1], [0], [0], [1], [0, 0, 1, 1], [], []>} : vector<2x128xf32>, vector<128x128xf32>, vector<2x128xf32> -> vector<2x128xf32>
    %c0_54 = arith.constant 0 : index
    %c0_55 = arith.constant 0 : index
    %131 = vector.load %arg5[%c0_54, %c0_55] : memref<1x128xf32, #tpu.memory_space<vmem>>, vector<1x128xf32>
    %132 = vector.broadcast %131 : vector<1x128xf32> to vector<2x128xf32>
    %133 = arith.addf %130, %132 : vector<2x128xf32>
    %cst_56 = arith.constant 5.000000e-01 : f32
    %134 = vector.broadcast %cst_56 : f32 to vector<2x128xf32>
    %135 = arith.mulf %134, %133 : vector<2x128xf32>
    %cst_57 = arith.constant 0.707106769 : f32
    %136 = vector.broadcast %cst_57 : f32 to vector<2x128xf32>
    %137 = arith.mulf %133, %136 : vector<2x128xf32>
    %138 = math.erf %137 : vector<2x128xf32>
    %cst_58 = arith.constant 1.000000e+00 : f32
    %139 = vector.broadcast %cst_58 : f32 to vector<2x128xf32>
    %140 = arith.addf %139, %138 : vector<2x128xf32>
    %141 = arith.mulf %135, %140 : vector<2x128xf32>
    %c0_59 = arith.constant 0 : index
    %c0_60 = arith.constant 0 : index
    %142 = vector.load %arg6[%c0_59, %c0_60] : memref<128x128xf32, #tpu.memory_space<vmem>>, vector<128x128xf32>
    %cst_61 = arith.constant dense<0.000000e+00> : vector<2x128xf32>
    %143 = tpu.matmul %141, %142, %cst_61 {dimension_numbers = #tpu.dot_dimension_numbers<[1], [0], [0], [1], [0, 0, 1, 1], [], []>} : vector<2x128xf32>, vector<128x128xf32>, vector<2x128xf32> -> vector<2x128xf32>
    %c0_62 = arith.constant 0 : index
    %c0_63 = arith.constant 0 : index
    %144 = vector.load %arg7[%c0_62, %c0_63] : memref<1x128xf32, #tpu.memory_space<vmem>>, vector<1x128xf32>
    %145 = vector.broadcast %144 : vector<1x128xf32> to vector<2x128xf32>
    %146 = arith.addf %143, %145 : vector<2x128xf32>
    %c0_64 = arith.constant 0 : index
    %c0_65 = arith.constant 0 : index
    %147 = vector.load %arg8[%c0_64, %c0_65] : memref<2x128xf32, #tpu.memory_space<vmem>>, vector<2x128xf32>
    tpu.vector_store %arg8[%c0_64, %c0_65], %146 {strides = array<i32>} : memref<2x128xf32, #tpu.memory_space<vmem>>, vector<2x128xf32>,
    return
  }
  func.func @transform_0(%arg0: i32) -> (i32, i32) {
    %c0_i32 = arith.constant 0 : i32
    %c0_i32_0 = arith.constant 0 : i32
    return %arg0, %c0_i32 : i32, i32
  }
  func.func @transform_1(%arg0: i32) -> (i32, i32) {
    %c0_i32 = arith.constant 0 : i32
    %c0_i32_0 = arith.constant 0 : i32
    %c0_i32_1 = arith.constant 0 : i32
    return %c0_i32, %c0_i32_0 : i32, i32
  }
  func.func @transform_2(%arg0: i32) -> (i32, i32, i32) {
    %c0_i32 = arith.constant 0 : i32
    %c0_i32_0 = arith.constant 0 : i32
    %c0_i32_1 = arith.constant 0 : i32
    %c0_i32_2 = arith.constant 0 : i32
    return %c0_i32, %c0_i32_0, %c0_i32_1 : i32, i32, i32
  }
  func.func @transform_3(%arg0: i32) -> (i32, i32) {
    %c0_i32 = arith.constant 0 : i32
    %c0_i32_0 = arith.constant 0 : i32
    %c0_i32_1 = arith.constant 0 : i32
    return %c0_i32, %c0_i32_0 : i32, i32
  }
  func.func @transform_4(%arg0: i32) -> (i32, i32) {
    %c0_i32 = arith.constant 0 : i32
    %c0_i32_0 = arith.constant 0 : i32
    %c0_i32_1 = arith.constant 0 : i32
    return %c0_i32, %c0_i32_0 : i32, i32
  }
  func.func @transform_5(%arg0: i32) -> (i32, i32) {
    %c0_i32 = arith.constant 0 : i32
    %c0_i32_0 = arith.constant 0 : i32
    %c0_i32_1 = arith.constant 0 : i32
    return %c0_i32, %c0_i32_0 : i32, i32
  }
  func.func @transform_6(%arg0: i32) -> (i32, i32) {
    %c0_i32 = arith.constant 0 : i32
    %c0_i32_0 = arith.constant 0 : i32
    %c0_i32_1 = arith.constant 0 : i32
    return %c0_i32, %c0_i32_0 : i32, i32
  }
  func.func @transform_7(%arg0: i32) -> (i32, i32) {
    %c0_i32 = arith.constant 0 : i32
    %c0_i32_0 = arith.constant 0 : i32
    return %arg0, %c0_i32 : i32, i32
  }
}

</mosaic_0001>

<llo_original>
// kernel: classification_forward.1
$region0: #{classification_forward.1}
  #allocation0 [shape = 'u32[]', space=smem, size = 0x4, offset = 0x4, fixed_abs, tag = 'smem constant byte address 0x4 - core index']
  #allocation1 [shape = 'u32[144,128]{1,0:T(1,128)}', space=vmem, size = 0x12000, scoped, tag = 'internal scratch']
  %s0 = inlined_call_operand.vmem [shape: s32[16,1], index: 0, kind: input, shape index: {}]
  %s1 = inlined_call_operand.hbm [shape: f32[128,128], index: 1, kind: input, shape index: {}]
  %s2 = inlined_call_operand.hbm [shape: f32[5,128,128], index: 2, kind: input, shape index: {}]
  %s3 = inlined_call_operand.hbm [shape: f32[128,128], index: 3, kind: input, shape index: {}]
  %s4 = inlined_call_operand.vmem [shape: f32[1,128], index: 4, kind: input, shape index: {}]
  %s5 = inlined_call_operand.hbm [shape: f32[128,128], index: 5, kind: input, shape index: {}]
  %s6 = inlined_call_operand.vmem [shape: f32[1,128], index: 6, kind: input, shape index: {}]
  %s7 = inlined_call_operand.hbm [shape: f32[2,128], index: 7, kind: output, shape index: {}]
  %s8 = sld [smem:[#allocation0]]
  $region54: #{classification_forward.1} parent=0
    _
  %s10 = ssub.s32 1, %s8
  %s11 = scalar_select 0, %s10, %s8
  $region1: #{classification_forward.1} parent=0
    #allocation2 [shape = 'u8[65536]{0}', space=vmem, size = 0x10000, scoped, tag = 'input window, operand 1, single buffered']
    #allocation3 [shape = 's32[1]{0}', space=sflag, size = 0x4, scoped, tag = 'scoped memory for classification_forward.1']
    #allocation4 [shape = 's32[1]{0}', space=sflag, size = 0x4, scoped, tag = 'scoped memory for classification_forward.1']
    #allocation5 [shape = 'u8[327680]{0}', space=vmem, size = 0x50000, scoped, tag = 'input window, operand 2, single buffered']
    #allocation6 [shape = 's32[1]{0}', space=sflag, size = 0x4, scoped, tag = 'scoped memory for classification_forward.1']
    #allocation7 [shape = 'u8[65536]{0}', space=vmem, size = 0x10000, scoped, tag = 'input window, operand 3, single buffered']
    #allocation8 [shape = 'u8[65536]{0}', space=vmem, size = 0x10000, scoped, tag = 'input window, operand 5, single buffered']
    #allocation9 [shape = 's32[1]{0}', space=sflag, size = 0x4, scoped, tag = 'scoped memory for classification_forward.1']
    #allocation10 [shape = 'u8[1024]{0}', space=vmem, size = 0x400, scoped, tag = 'output window, operand 0, single buffered']
    %12 = vsyncpa [#allocation3], 0
    %13 = vsyncpa [#allocation6], 0
    %14 = vsyncpa [#allocation9], 0
    %15 = vsyncpa [#allocation4], 0
    // Predicated region
    $region2: #{classification_forward.1} parent=1 // pred_check
      _
    $region3: #{classification_forward.1} parent=1 // pred_check_branch
      %17 = sbr.rel (0) target = $region5
    $region4: #{classification_forward.1} parent=1 // pred_region
      _
    $region5: #{classification_forward.1} parent=1 // pred_fallthru
      _
    // Predicated region
    $region6: #{classification_forward.1} parent=1 // pred_check
      _
    $region7: #{classification_forward.1} parent=1 // pred_check_branch
      %19 = sbr.rel (0) target = $region9
    $region8: #{classification_forward.1} parent=1 // pred_region
      %s21 = ssub.s32 2048, 2048
      %22 = vsyncadd [#allocation3], %s21
      %s23 = sshll.u32 [#allocation2], 4
      %s24 = int_to_ptr.vmem [resolvable:$true] %s23
      %29 = dma.hbm_to_vmem [thread:$0]  %s1, 2048, %s24, [#allocation3], 128, 128, 8
    $region9: #{classification_forward.1} parent=1 // pred_fallthru
      _
    // Predicated region
    $region10: #{classification_forward.1} parent=1 // pred_check
      _
    $region11: #{classification_forward.1} parent=1 // pred_check_branch
      %31 = sbr.rel (0) target = $region13
    $region12: #{classification_forward.1} parent=1 // pred_region
      %s33 = ssub.s32 10240, 10240
      %34 = vsyncadd [#allocation6], %s33
      %s35 = sshll.u32 [#allocation5], 4
      %s36 = int_to_ptr.vmem [resolvable:$true] %s35
      %41 = dma.hbm_to_vmem [thread:$0]  %s2, 10240, %s36, [#allocation6], 128, 128, 8
    $region13: #{classification_forward.1} parent=1 // pred_fallthru
      _
    // Predicated region
    $region14: #{classification_forward.1} parent=1 // pred_check
      _
    $region15: #{classification_forward.1} parent=1 // pred_check_branch
      %43 = sbr.rel (0) target = $region17
    $region16: #{classification_forward.1} parent=1 // pred_region
      %s45 = ssub.s32 2048, 2048
      %46 = vsyncadd [#allocation6], %s45
      %s47 = sshll.u32 [#allocation7], 4
      %s48 = int_to_ptr.vmem [resolvable:$true] %s47
      %53 = dma.hbm_to_vmem [thread:$0]  %s3, 2048, %s48, [#allocation6], 128, 128, 8
    $region17: #{classification_forward.1} parent=1 // pred_fallthru
      _
    // Predicated region
    $region18: #{classification_forward.1} parent=1 // pred_check
      _
    $region19: #{classification_forward.1} parent=1 // pred_check_branch
      %55 = sbr.rel (0) target = $region21
    $region20: #{classification_forward.1} parent=1 // pred_region
      _
    $region21: #{classification_forward.1} parent=1 // pred_fallthru
      _
    // Predicated region
    $region22: #{classification_forward.1} parent=1 // pred_check
      _
    $region23: #{classification_forward.1} parent=1 // pred_check_branch
      %57 = sbr.rel (0) target = $region25
    $region24: #{classification_forward.1} parent=1 // pred_region
      %s59 = ssub.s32 2048, 2048
      %60 = vsyncadd [#allocation9], %s59
      %s61 = sshll.u32 [#allocation8], 4
      %s62 = int_to_ptr.vmem [resolvable:$true] %s61
      %67 = dma.hbm_to_vmem [thread:$0]  %s5, 2048, %s62, [#allocation9], 128, 128, 8
    $region25: #{classification_forward.1} parent=1 // pred_fallthru
      _
    // Predicated region
    $region26: #{classification_forward.1} parent=1 // pred_check
      _
    $region27: #{classification_forward.1} parent=1 // pred_check_branch
      %69 = sbr.rel (0) target = $region29
    $region28: #{classification_forward.1} parent=1 // pred_region
      _
    $region29: #{classification_forward.1} parent=1 // pred_fallthru
      _
    // Predicated region
    $region30: #{classification_forward.1} parent=1 // pred_check
      _
    $region31: #{classification_forward.1} parent=1 // pred_check_branch
      %71 = sbr.rel (0) target = $region33
    $region32: #{classification_forward.1} parent=1 // pred_region
      %72 = dma.done [#allocation3], 2048
    $region33: #{classification_forward.1} parent=1 // pred_fallthru
      _
    // Predicated region
    $region34: #{classification_forward.1} parent=1 // pred_check
      _
    $region35: #{classification_forward.1} parent=1 // pred_check_branch
      %74 = sbr.rel (0) target = $region37
    $region36: #{classification_forward.1} parent=1 // pred_region
      %75 = dma.done [#allocation6], 10240
    $region37: #{classification_forward.1} parent=1 // pred_fallthru
      _
    // Predicated region
    $region38: #{classification_forward.1} parent=1 // pred_check
      _
    $region39: #{classification_forward.1} parent=1 // pred_check_branch
      %77 = sbr.rel (0) target = $region41
    $region40: #{classification_forward.1} parent=1 // pred_region
      %78 = dma.done [#allocation6], 2048
    $region41: #{classification_forward.1} parent=1 // pred_fallthru
      _
    // Predicated region
    $region42: #{classification_forward.1} parent=1 // pred_check
      _
    $region43: #{classification_forward.1} parent=1 // pred_check_branch
      %80 = sbr.rel (0) target = $region45
    $region44: #{classification_forward.1} parent=1 // pred_region
      %81 = dma.done [#allocation9], 2048
    $region45: #{classification_forward.1} parent=1 // pred_fallthru
      _
    %v82 = vld [vmem:[%s0] sm:$0xff]
    %v83 = vld [vmem:[%s0 + $0x8] sm:$0xff]
    %v84 = vlaneseq
    %v85 = vand.u32 %v84, 127
    %86 = vset.pattern.permute.xlu0 0
    %87 = vperm.xlu0 %86, %v82
    %v88 = vpop.permute.xlu0 %87
    %89 = vset.pattern.permute.xlu0 0
    %90 = vperm.xlu0 %89, %v83
    %v91 = vpop.permute.xlu0 %90
    %vm92 = vcmp.eq.s32.totalorder %v85, %v88
    %vm93 = vcmp.eq.s32.totalorder %v85, %v91
    %v94 = vsel %vm92, 1, 0
    %v95 = vsel %vm93, 1, 0
    %v96 = vcvt.s32.f32 %v94
    %v97 = vcvt.s32.f32 %v95
    %v98 = vld [vmem:[#allocation2] sm:$0xff]
    %v99 = vld [vmem:[#allocation2 + $0x8] sm:$0xff]
    %v100 = vld [vmem:[#allocation2 + $0x10] sm:$0xff]
    %v101 = vld [vmem:[#allocation2 + $0x18] sm:$0xff]
    %v102 = vld [vmem:[#allocation2 + $0x20] sm:$0xff]
    %v103 = vld [vmem:[#allocation2 + $0x28] sm:$0xff]
    %v104 = vld [vmem:[#allocation2 + $0x30] sm:$0xff]
    %v105 = vld [vmem:[#allocation2 + $0x38] sm:$0xff]
    %v106 = vld [vmem:[#allocation2 + $0x40] sm:$0xff]
    %v107 = vld [vmem:[#allocation2 + $0x48] sm:$0xff]
    %v108 = vld [vmem:[#allocation2 + $0x50] sm:$0xff]
    %v109 = vld [vmem:[#allocation2 + $0x58] sm:$0xff]
    %v110 = vld [vmem:[#allocation2 + $0x60] sm:$0xff]
    %v111 = vld [vmem:[#allocation2 + $0x68] sm:$0xff]
    %v112 = vld [vmem:[#allocation2 + $0x70] sm:$0xff]
    %v113 = vld [vmem:[#allocation2 + $0x78] sm:$0xff]
    %114 = vmatprep.subr.mxu0 0.0
    %115 = vmatpush1.msra.mxu0 %v113
    %116 = vmatprep.subr.mxu0 0.0
    %117 = vmatpush1.msra.mxu0 %v112
    %118 = vmatprep.subr.mxu0 0.0
    %119 = vmatpush1.msra.mxu0 %v111
    %120 = vmatprep.subr.mxu0 0.0
    %121 = vmatpush1.msra.mxu0 %v110
    %122 = vmatprep.subr.mxu0 0.0
    %123 = vmatpush1.msra.mxu0 %v109
    %124 = vmatprep.subr.mxu0 0.0
    %125 = vmatpush1.msra.mxu0 %v108
    %126 = vmatprep.subr.mxu0 0.0
    %127 = vmatpush1.msra.mxu0 %v107
    %128 = vmatprep.subr.mxu0 0.0
    %129 = vmatpush1.msra.mxu0 %v106
    %130 = vmatprep.subr.mxu0 0.0
    %131 = vmatpush1.msra.mxu0 %v105
    %132 = vmatprep.subr.mxu0 0.0
    %133 = vmatpush1.msra.mxu0 %v104
    %134 = vmatprep.subr.mxu0 0.0
    %135 = vmatpush1.msra.mxu0 %v103
    %136 = vmatprep.subr.mxu0 0.0
    %137 = vmatpush1.msra.mxu0 %v102
    %138 = vmatprep.subr.mxu0 0.0
    %139 = vmatpush1.msra.mxu0 %v101
    %140 = vmatprep.subr.mxu0 0.0
    %141 = vmatpush1.msra.mxu0 %v100
    %142 = vmatprep.subr.mxu0 0.0
    %143 = vmatpush1.msra.mxu0 %v99
    %144 = vmatprep.subr.mxu0 0.0
    %145 = vmatpush1.msra.mxu0 %v98
    %146 = vmatprep.subr.mxu0 0.0
    %147 = vmatpush2.msra.mxu0 0.0
    %148 = vmatprep.subr.mxu0 0.0
    %149 = vmatpush2.msra.mxu0 0.0
    %150 = vmatprep.subr.mxu0 0.0
    %151 = vmatpush2.msra.mxu0 0.0
    %152 = vmatprep.subr.mxu0 0.0
    %153 = vmatpush2.msra.mxu0 0.0
    %154 = vmatprep.subr.mxu0 0.0
    %155 = vmatpush2.msra.mxu0 0.0
    %156 = vmatprep.subr.mxu0 0.0
    %157 = vmatpush2.msra.mxu0 0.0
    %158 = vmatprep.subr.mxu0 0.0
    %159 = vmatpush2.msra.mxu0 0.0
    %160 = vmatprep.subr.mxu0 0.0
    %161 = vmatpush2.msra.mxu0 0.0
    %162 = vmatprep.subr.mxu0 0.0
    %163 = vmatpush2.msra.mxu0 0.0
    %164 = vmatprep.subr.mxu0 0.0
    %165 = vmatpush2.msra.mxu0 0.0
    %166 = vmatprep.subr.mxu0 0.0
    %167 = vmatpush2.msra.mxu0 0.0
    %168 = vmatprep.subr.mxu0 0.0
    %169 = vmatpush2.msra.mxu0 0.0
    %170 = vmatprep.subr.mxu0 0.0
    %171 = vmatpush2.msra.mxu0 0.0
    %172 = vmatprep.subr.mxu0 0.0
    %173 = vmatpush2.msra.mxu0 0.0
    %174 = vmatprep.subr.mxu0 0.0
    %175 = vmatpush2.msra.mxu0 0.0
    %176 = vmatprep.subr.mxu0 0.0
    %177 = vmatpush2.msra.mxu0 0.0
    %178 = vmatprep.mubr.f32.mxu0 0.0
    %179 = vmatmul.mubr.f32.gmra.mxu0 %v96
    %v180 = vpop.f32.mrf.mxu0
    %v181 = vadd.f32 0.0, %v180
    %v182 = vpop.f32.mrf.mxu0
    %183 = vmatprep.mubr.f32.mxu0 0.0
    %184 = vmatmul.mubr.f32.gmra.mxu0 %v97
    %v185 = vpop.f32.mrf.mxu0
    %v186 = vadd.f32 0.0, %v185
    %v187 = vpop.f32.mrf.mxu0
    %188 = vdwg.mxu0
    %v189 = vlaneseq
    %v190 = vshrl.u32 %v189, 7
    %v191 = vadd.s32 %v190, 8
    %vm192 = vcmp.lt.s32.totalorder %v190, 0
    %v193 = vsub.s32 0, %v190
    %v194 = vsel %vm192, %v193, %v190
    %v195 = vshrl.u32 %v194, 3
    %v196 = vand.u32 %v194, 7
    %v197 = vsub.s32 0, %v196
    %v198 = vsel %vm192, %v197, %v196
    %vm199 = vcmp.lt.s32.totalorder %v191, 0
    %v200 = vsub.s32 0, %v191
    %v201 = vsel %vm199, %v200, %v191
    %v202 = vshrl.u32 %v201, 3
    %v203 = vand.u32 %v201, 7
    %v204 = vsub.s32 0, %v203
    %v205 = vsel %vm199, %v204, %v203
    %vm206 = vcmp.ne.s32.totalorder %v198, 0
    %vm207 = vcmp.ne.s32.totalorder %v205, 0
    %vm208 = vcmp.lt.s32.totalorder %v198, 0
    %vm209 = vcmp.lt.s32.totalorder %v205, 0
    %vm210 = vmand %vm208, %vm206
    %vm211 = vmand %vm209, %vm207
    %v212 = vadd.s32 %v198, 8
    %v213 = vadd.s32 %v205, 8
    %v214 = vsel %vm210, %v212, %v198
    %v215 = vsel %vm211, %v213, %v205
    %v216 = vadd.s32 %v214, 4294967294
    %v217 = vadd.s32 %v215, 4294967294
    %vm218 = vcmp.ge.s32.totalorder %v216, 0
    %vm219 = vcmp.ge.s32.totalorder %v217, 0
    %vm220 = vcmp.lt.s32.totalorder %v216, 8
    %vm221 = vcmp.lt.s32.totalorder %v217, 8
    %vm222 = vmand %vm218, %vm220
    %vm223 = vmand %vm219, %vm221
    %v224 = vadd.s32 %v190, 4294967294
    %v225 = vadd.s32 %v191, 4294967294
    %vm226 = vcmp.eq.s32.totalorder %v85, %v224
    %vm227 = vcmp.eq.s32.totalorder %v85, %v225
    %vm228 = vmand %vm222, %vm226
    %vm229 = vmand %vm223, %vm227
    %v230 = vsel %vm228, 1, 0
    %v231 = vsel %vm229, 1, 0
    %v232 = vcvt.s32.f32 %v230
    %v233 = vcvt.s32.f32 %v231
    %vm234 = vcmask 130048
    %v236 = vsel %vm234, %v232, 0
    %v239 = vsel %vm234, %v233, 0
    %241 = vmatprep.subr.mxu0 0.0
    %242 = vmatpush1.msra.mxu0 0.0
    %243 = vmatprep.subr.mxu0 0.0
    %244 = vmatpush1.msra.mxu0 0.0
    %245 = vmatprep.subr.mxu0 0.0
    %246 = vmatpush1.msra.mxu0 0.0
    %247 = vmatprep.subr.mxu0 0.0
    %248 = vmatpush1.msra.mxu0 0.0
    %249 = vmatprep.subr.mxu0 0.0
    %250 = vmatpush1.msra.mxu0 0.0
    %251 = vmatprep.subr.mxu0 0.0
    %252 = vmatpush1.msra.mxu0 0.0
    %253 = vmatprep.subr.mxu0 0.0
    %254 = vmatpush1.msra.mxu0 0.0
    %255 = vmatprep.subr.mxu0 0.0
    %256 = vmatpush1.msra.mxu0 0.0
    %257 = vmatprep.subr.mxu0 0.0
    %258 = vmatpush1.msra.mxu0 0.0
    %259 = vmatprep.subr.mxu0 0.0
    %260 = vmatpush1.msra.mxu0 0.0
    %261 = vmatprep.subr.mxu0 0.0
    %262 = vmatpush1.msra.mxu0 0.0
    %263 = vmatprep.subr.mxu0 0.0
    %264 = vmatpush1.msra.mxu0 0.0
    %265 = vmatprep.subr.mxu0 0.0
    %266 = vmatpush1.msra.mxu0 0.0
    %267 = vmatprep.subr.mxu0 0.0
    %268 = vmatpush1.msra.mxu0 0.0
    %269 = vmatprep.subr.mxu0 0.0
    %270 = vmatpush1.msra.mxu0 %v186
    %271 = vmatprep.subr.mxu0 0.0
    %272 = vmatpush1.msra.mxu0 %v181
    %273 = vmatprep.subr.mxu0 0.0
    %274 = vmatpush2.msra.mxu0 0.0
    %275 = vmatprep.subr.mxu0 0.0
    %276 = vmatpush2.msra.mxu0 0.0
    %277 = vmatprep.subr.mxu0 0.0
    %278 = vmatpush2.msra.mxu0 0.0
    %279 = vmatprep.subr.mxu0 0.0
    %280 = vmatpush2.msra.mxu0 0.0
    %281 = vmatprep.subr.mxu0 0.0
    %282 = vmatpush2.msra.mxu0 0.0
    %283 = vmatprep.subr.mxu0 0.0
    %284 = vmatpush2.msra.mxu0 0.0
    %285 = vmatprep.subr.mxu0 0.0
    %286 = vmatpush2.msra.mxu0 0.0
    %287 = vmatprep.subr.mxu0 0.0
    %288 = vmatpush2.msra.mxu0 0.0
    %289 = vmatprep.subr.mxu0 0.0
    %290 = vmatpush2.msra.mxu0 0.0
    %291 = vmatprep.subr.mxu0 0.0
    %292 = vmatpush2.msra.mxu0 0.0
    %293 = vmatprep.subr.mxu0 0.0
    %294 = vmatpush2.msra.mxu0 0.0
    %295 = vmatprep.subr.mxu0 0.0
    %296 = vmatpush2.msra.mxu0 0.0
    %297 = vmatprep.subr.mxu0 0.0
    %298 = vmatpush2.msra.mxu0 0.0
    %299 = vmatprep.subr.mxu0 0.0
    %300 = vmatpush2.msra.mxu0 0.0
    %301 = vmatprep.subr.mxu0 0.0
    %302 = vmatpush2.msra.mxu0 0.0
    %303 = vmatprep.subr.mxu0 0.0
    %304 = vmatpush2.msra.mxu0 0.0
    %305 = vmatprep.mubr.f32.mxu0 0.0
    %306 = vmatmul.mubr.f32.gmra.mxu0 %v236
    %v307 = vpop.f32.mrf.mxu0
    %v308 = vadd.f32 0.0, %v307
    %v309 = vpop.f32.mrf.mxu0
    %310 = vmatprep.mubr.f32.mxu0 0.0
    %311 = vmatmul.mubr.f32.gmra.mxu0 %v239
    %v312 = vpop.f32.mrf.mxu0
    %v313 = vadd.f32 0.0, %v312
    %v314 = vpop.f32.mrf.mxu0
    %315 = vdwg.mxu0
    %v316 = vld [vmem:[#allocation5] sm:$0xff]
    %v317 = vld [vmem:[#allocation5 + $0x8] sm:$0xff]
    %v318 = vld [vmem:[#allocation5 + $0x10] sm:$0xff]
    %v319 = vld [vmem:[#allocation5 + $0x18] sm:$0xff]
    %v320 = vld [vmem:[#allocation5 + $0x20] sm:$0xff]
    %v321 = vld [vmem:[#allocation5 + $0x28] sm:$0xff]
    %v322 = vld [vmem:[#allocation5 + $0x30] sm:$0xff]
    %v323 = vld [vmem:[#allocation5 + $0x38] sm:$0xff]
    %v324 = vld [vmem:[#allocation5 + $0x40] sm:$0xff]
    %v325 = vld [vmem:[#allocation5 + $0x48] sm:$0xff]
    %v326 = vld [vmem:[#allocation5 + $0x50] sm:$0xff]
    %v327 = vld [vmem:[#allocation5 + $0x58] sm:$0xff]
    %v328 = vld [vmem:[#allocation5 + $0x60] sm:$0xff]
    %v329 = vld [vmem:[#allocation5 + $0x68] sm:$0xff]
    %v330 = vld [vmem:[#allocation5 + $0x70] sm:$0xff]
    %v331 = vld [vmem:[#allocation5 + $0x78] sm:$0xff]
    %v332 = vadd.s32 %v214, 4294967295
    %v333 = vadd.s32 %v215, 4294967295
    %vm334 = vcmp.ge.s32.totalorder %v332, 0
    %vm335 = vcmp.ge.s32.totalorder %v333, 0
    %vm336 = vcmp.lt.s32.totalorder %v332, 8
    %vm337 = vcmp.lt.s32.totalorder %v333, 8
    %vm338 = vmand %vm334, %vm336
    %vm339 = vmand %vm335, %vm337
    %v340 = vadd.s32 %v190, 4294967295
    %v341 = vadd.s32 %v191, 4294967295
    %vm342 = vcmp.eq.s32.totalorder %v85, %v340
    %vm343 = vcmp.eq.s32.totalorder %v85, %v341
    %vm344 = vmand %vm338, %vm342
    %vm345 = vmand %vm339, %vm343
    %v346 = vsel %vm344, 1, 0
    %v347 = vsel %vm345, 1, 0
    %v348 = vcvt.s32.f32 %v346
    %v349 = vcvt.s32.f32 %v347
    %v351 = vsel %vm234, %v348, 0
    %v354 = vsel %vm234, %v349, 0
    %356 = vmatprep.subr.mxu0 0.0
    %357 = vmatpush1.msra.mxu0 0.0
    %358 = vmatprep.subr.mxu0 0.0
    %359 = vmatpush1.msra.mxu0 0.0
    %360 = vmatprep.subr.mxu0 0.0
    %361 = vmatpush1.msra.mxu0 0.0
    %362 = vmatprep.subr.mxu0 0.0
    %363 = vmatpush1.msra.mxu0 0.0
    %364 = vmatprep.subr.mxu0 0.0
    %365 = vmatpush1.msra.mxu0 0.0
    %366 = vmatprep.subr.mxu0 0.0
    %367 = vmatpush1.msra.mxu0 0.0
    %368 = vmatprep.subr.mxu0 0.0
    %369 = vmatpush1.msra.mxu0 0.0
    %370 = vmatprep.subr.mxu0 0.0
    %371 = vmatpush1.msra.mxu0 0.0
    %372 = vmatprep.subr.mxu0 0.0
    %373 = vmatpush1.msra.mxu0 0.0
    %374 = vmatprep.subr.mxu0 0.0
    %375 = vmatpush1.msra.mxu0 0.0
    %376 = vmatprep.subr.mxu0 0.0
    %377 = vmatpush1.msra.mxu0 0.0
    %378 = vmatprep.subr.mxu0 0.0
    %379 = vmatpush1.msra.mxu0 0.0
    %380 = vmatprep.subr.mxu0 0.0
    %381 = vmatpush1.msra.mxu0 0.0
    %382 = vmatprep.subr.mxu0 0.0
    %383 = vmatpush1.msra.mxu0 0.0
    %384 = vmatprep.subr.mxu0 0.0
    %385 = vmatpush1.msra.mxu0 %v186
    %386 = vmatprep.subr.mxu0 0.0
    %387 = vmatpush1.msra.mxu0 %v181
    %388 = vmatprep.subr.mxu0 0.0
    %389 = vmatpush2.msra.mxu0 0.0
    %390 = vmatprep.subr.mxu0 0.0
    %391 = vmatpush2.msra.mxu0 0.0
    %392 = vmatprep.subr.mxu0 0.0
    %393 = vmatpush2.msra.mxu0 0.0
    %394 = vmatprep.subr.mxu0 0.0
    %395 = vmatpush2.msra.mxu0 0.0
    %396 = vmatprep.subr.mxu0 0.0
    %397 = vmatpush2.msra.mxu0 0.0
    %398 = vmatprep.subr.mxu0 0.0
    %399 = vmatpush2.msra.mxu0 0.0
    %400 = vmatprep.subr.mxu0 0.0
    %401 = vmatpush2.msra.mxu0 0.0
    %402 = vmatprep.subr.mxu0 0.0
    %403 = vmatpush2.msra.mxu0 0.0
    %404 = vmatprep.subr.mxu0 0.0
    %405 = vmatpush2.msra.mxu0 0.0
    %406 = vmatprep.subr.mxu0 0.0
    %407 = vmatpush2.msra.mxu0 0.0
    %408 = vmatprep.subr.mxu0 0.0
    %409 = vmatpush2.msra.mxu0 0.0
    %410 = vmatprep.subr.mxu0 0.0
    %411 = vmatpush2.msra.mxu0 0.0
    %412 = vmatprep.subr.mxu0 0.0
    %413 = vmatpush2.msra.mxu0 0.0
    %414 = vmatprep.subr.mxu0 0.0
    %415 = vmatpush2.msra.mxu0 0.0
    %416 = vmatprep.subr.mxu0 0.0
    %417 = vmatpush2.msra.mxu0 0.0
    %418 = vmatprep.subr.mxu0 0.0
    %419 = vmatpush2.msra.mxu0 0.0
    %420 = vmatprep.mubr.f32.mxu0 0.0
    %421 = vmatmul.mubr.f32.gmra.mxu0 %v351
    %v422 = vpop.f32.mrf.mxu0
    %v423 = vadd.f32 0.0, %v422
    %v424 = vpop.f32.mrf.mxu0
    %425 = vmatprep.mubr.f32.mxu0 0.0
    %426 = vmatmul.mubr.f32.gmra.mxu0 %v354
    %v427 = vpop.f32.mrf.mxu0
    %v428 = vadd.f32 0.0, %v427
    %v429 = vpop.f32.mrf.mxu0
    %430 = vdwg.mxu0
    %s431 = scalar_lea.vmem [#allocation5], 128
    %v432 = vld [vmem:[%s431] sm:$0xff]
    %v433 = vld [vmem:[%s431 + $0x8] sm:$0xff]
    %v434 = vld [vmem:[%s431 + $0x10] sm:$0xff]
    %v435 = vld [vmem:[%s431 + $0x18] sm:$0xff]
    %v436 = vld [vmem:[%s431 + $0x20] sm:$0xff]
    %v437 = vld [vmem:[%s431 + $0x28] sm:$0xff]
    %v438 = vld [vmem:[%s431 + $0x30] sm:$0xff]
    %v439 = vld [vmem:[%s431 + $0x38] sm:$0xff]
    %v440 = vld [vmem:[%s431 + $0x40] sm:$0xff]
    %v441 = vld [vmem:[%s431 + $0x48] sm:$0xff]
    %v442 = vld [vmem:[%s431 + $0x50] sm:$0xff]
    %v443 = vld [vmem:[%s431 + $0x58] sm:$0xff]
    %v444 = vld [vmem:[%s431 + $0x60] sm:$0xff]
    %v445 = vld [vmem:[%s431 + $0x68] sm:$0xff]
    %v446 = vld [vmem:[%s431 + $0x70] sm:$0xff]
    %v447 = vld [vmem:[%s431 + $0x78] sm:$0xff]
    %448 = vmatprep.subr.mxu0 0.0
    %449 = vmatpush1.msra.mxu0 %v447
    %450 = vmatprep.subr.mxu0 0.0
    %451 = vmatpush1.msra.mxu0 %v446
    %452 = vmatprep.subr.mxu0 0.0
    %453 = vmatpush1.msra.mxu0 %v445
    %454 = vmatprep.subr.mxu0 0.0
    %455 = vmatpush1.msra.mxu0 %v444
    %456 = vmatprep.subr.mxu0 0.0
    %457 = vmatpush1.msra.mxu0 %v443
    %458 = vmatprep.subr.mxu0 0.0
    %459 = vmatpush1.msra.mxu0 %v442
    %460 = vmatprep.subr.mxu0 0.0
    %461 = vmatpush1.msra.mxu0 %v441
    %462 = vmatprep.subr.mxu0 0.0
    %463 = vmatpush1.msra.mxu0 %v440
    %464 = vmatprep.subr.mxu0 0.0
    %465 = vmatpush1.msra.mxu0 %v439
    %466 = vmatprep.subr.mxu0 0.0
    %467 = vmatpush1.msra.mxu0 %v438
    %468 = vmatprep.subr.mxu0 0.0
    %469 = vmatpush1.msra.mxu0 %v437
    %470 = vmatprep.subr.mxu0 0.0
    %471 = vmatpush1.msra.mxu0 %v436
    %472 = vmatprep.subr.mxu0 0.0
    %473 = vmatpush1.msra.mxu0 %v435
    %474 = vmatprep.subr.mxu0 0.0
    %475 = vmatpush1.msra.mxu0 %v434
    %476 = vmatprep.subr.mxu0 0.0
    %477 = vmatpush1.msra.mxu0 %v433
    %478 = vmatprep.subr.mxu0 0.0
    %479 = vmatpush1.msra.mxu0 %v432
    %480 = vmatprep.subr.mxu0 0.0
    %481 = vmatpush2.msra.mxu0 0.0
    %482 = vmatprep.subr.mxu0 0.0
    %483 = vmatpush2.msra.mxu0 0.0
    %484 = vmatprep.subr.mxu0 0.0
    %485 = vmatpush2.msra.mxu0 0.0
    %486 = vmatprep.subr.mxu0 0.0
    %487 = vmatpush2.msra.mxu0 0.0
    %488 = vmatprep.subr.mxu0 0.0
    %489 = vmatpush2.msra.mxu0 0.0
    %490 = vmatprep.subr.mxu0 0.0
    %491 = vmatpush2.msra.mxu0 0.0
    %492 = vmatprep.subr.mxu0 0.0
    %493 = vmatpush2.msra.mxu0 0.0
    %494 = vmatprep.subr.mxu0 0.0
    %495 = vmatpush2.msra.mxu0 0.0
    %496 = vmatprep.subr.mxu0 0.0
    %497 = vmatpush2.msra.mxu0 0.0
    %498 = vmatprep.subr.mxu0 0.0
    %499 = vmatpush2.msra.mxu0 0.0
    %500 = vmatprep.subr.mxu0 0.0
    %501 = vmatpush2.msra.mxu0 0.0
    %502 = vmatprep.subr.mxu0 0.0
    %503 = vmatpush2.msra.mxu0 0.0
    %504 = vmatprep.subr.mxu0 0.0
    %505 = vmatpush2.msra.mxu0 0.0
    %506 = vmatprep.subr.mxu0 0.0
    %507 = vmatpush2.msra.mxu0 0.0
    %508 = vmatprep.subr.mxu0 0.0
    %509 = vmatpush2.msra.mxu0 0.0
    %510 = vmatprep.subr.mxu0 0.0
    %511 = vmatpush2.msra.mxu0 0.0
    %512 = vmatprep.mubr.f32.mxu0 0.0
    %513 = vmatmul.mubr.f32.gmra.mxu0 %v423
    %v514 = vpop.f32.mrf.mxu0
    %v515 = vadd.f32 0.0, %v514
    %v516 = vpop.f32.mrf.mxu0
    %517 = vmatprep.mubr.f32.mxu0 0.0
    %518 = vmatmul.mubr.f32.gmra.mxu0 %v428
    %v519 = vpop.f32.mrf.mxu0
    %v520 = vadd.f32 0.0, %v519
    %v521 = vpop.f32.mrf.mxu0
    %522 = vdwg.mxu0
    %523 = vmatprep.subr.mxu0 0.0
    %524 = vmatpush1.msra.mxu0 %v331
    %525 = vmatprep.subr.mxu0 0.0
    %526 = vmatpush1.msra.mxu0 %v330
    %527 = vmatprep.subr.mxu0 0.0
    %528 = vmatpush1.msra.mxu0 %v329
    %529 = vmatprep.subr.mxu0 0.0
    %530 = vmatpush1.msra.mxu0 %v328
    %531 = vmatprep.subr.mxu0 0.0
    %532 = vmatpush1.msra.mxu0 %v327
    %533 = vmatprep.subr.mxu0 0.0
    %534 = vmatpush1.msra.mxu0 %v326
    %535 = vmatprep.subr.mxu0 0.0
    %536 = vmatpush1.msra.mxu0 %v325
    %537 = vmatprep.subr.mxu0 0.0
    %538 = vmatpush1.msra.mxu0 %v324
    %539 = vmatprep.subr.mxu0 0.0
    %540 = vmatpush1.msra.mxu0 %v323
    %541 = vmatprep.subr.mxu0 0.0
    %542 = vmatpush1.msra.mxu0 %v322
    %543 = vmatprep.subr.mxu0 0.0
    %544 = vmatpush1.msra.mxu0 %v321
    %545 = vmatprep.subr.mxu0 0.0
    %546 = vmatpush1.msra.mxu0 %v320
    %547 = vmatprep.subr.mxu0 0.0
    %548 = vmatpush1.msra.mxu0 %v319
    %549 = vmatprep.subr.mxu0 0.0
    %550 = vmatpush1.msra.mxu0 %v318
    %551 = vmatprep.subr.mxu0 0.0
    %552 = vmatpush1.msra.mxu0 %v317
    %553 = vmatprep.subr.mxu0 0.0
    %554 = vmatpush1.msra.mxu0 %v316
    %555 = vmatprep.subr.mxu0 0.0
    %556 = vmatpush2.msra.mxu0 0.0
    %557 = vmatprep.subr.mxu0 0.0
    %558 = vmatpush2.msra.mxu0 0.0
    %559 = vmatprep.subr.mxu0 0.0
    %560 = vmatpush2.msra.mxu0 0.0
    %561 = vmatprep.subr.mxu0 0.0
    %562 = vmatpush2.msra.mxu0 0.0
    %563 = vmatprep.subr.mxu0 0.0
    %564 = vmatpush2.msra.mxu0 0.0
    %565 = vmatprep.subr.mxu0 0.0
    %566 = vmatpush2.msra.mxu0 0.0
    %567 = vmatprep.subr.mxu0 0.0
    %568 = vmatpush2.msra.mxu0 0.0
    %569 = vmatprep.subr.mxu0 0.0
    %570 = vmatpush2.msra.mxu0 0.0
    %571 = vmatprep.subr.mxu0 0.0
    %572 = vmatpush2.msra.mxu0 0.0
    %573 = vmatprep.subr.mxu0 0.0
    %574 = vmatpush2.msra.mxu0 0.0
    %575 = vmatprep.subr.mxu0 0.0
    %576 = vmatpush2.msra.mxu0 0.0
    %577 = vmatprep.subr.mxu0 0.0
    %578 = vmatpush2.msra.mxu0 0.0
    %579 = vmatprep.subr.mxu0 0.0
    %580 = vmatpush2.msra.mxu0 0.0
    %581 = vmatprep.subr.mxu0 0.0
    %582 = vmatpush2.msra.mxu0 0.0
    %583 = vmatprep.subr.mxu0 0.0
    %584 = vmatpush2.msra.mxu0 0.0
    %585 = vmatprep.subr.mxu0 0.0
    %586 = vmatpush2.msra.mxu0 0.0
    %587 = vmatprep.mubr.f32.mxu0 0.0
    %588 = vmatmul.mubr.f32.gmra.mxu0 %v308
    %v589 = vpop.f32.mrf.mxu0
    %v590 = vadd.f32 %v515, %v589
    %v591 = vpop.f32.mrf.mxu0
    %592 = vmatprep.mubr.f32.mxu0 0.0
    %593 = vmatmul.mubr.f32.gmra.mxu0 %v313
    %v594 = vpop.f32.mrf.mxu0
    %v595 = vadd.f32 %v520, %v594
    %v596 = vpop.f32.mrf.mxu0
    %597 = vdwg.mxu0
    %vm598 = vcmp.ge.s32.totalorder %v214, 0
    %vm599 = vcmp.ge.s32.totalorder %v215, 0
    %vm600 = vcmp.lt.s32.totalorder %v214, 8
    %vm601 = vcmp.lt.s32.totalorder %v215, 8
    %vm602 = vmand %vm598, %vm600
    %vm603 = vmand %vm599, %vm601
    %vm604 = vcmp.eq.s32.totalorder %v85, %v190
    %vm605 = vcmp.eq.s32.totalorder %v85, %v191
    %vm606 = vmand %vm602, %vm604
    %vm607 = vmand %vm603, %vm605
    %v608 = vsel %vm606, 1, 0
    %v609 = vsel %vm607, 1, 0
    %v610 = vcvt.s32.f32 %v608
    %v611 = vcvt.s32.f32 %v609
    %v613 = vsel %vm234, %v610, 0
    %v616 = vsel %vm234, %v611, 0
    %618 = vmatprep.subr.mxu0 0.0
    %619 = vmatpush1.msra.mxu0 0.0
    %620 = vmatprep.subr.mxu0 0.0
    %621 = vmatpush1.msra.mxu0 0.0
    %622 = vmatprep.subr.mxu0 0.0
    %623 = vmatpush1.msra.mxu0 0.0
    %624 = vmatprep.subr.mxu0 0.0
    %625 = vmatpush1.msra.mxu0 0.0
    %626 = vmatprep.subr.mxu0 0.0
    %627 = vmatpush1.msra.mxu0 0.0
    %628 = vmatprep.subr.mxu0 0.0
    %629 = vmatpush1.msra.mxu0 0.0
    %630 = vmatprep.subr.mxu0 0.0
    %631 = vmatpush1.msra.mxu0 0.0
    %632 = vmatprep.subr.mxu0 0.0
    %633 = vmatpush1.msra.mxu0 0.0
    %634 = vmatprep.subr.mxu0 0.0
    %635 = vmatpush1.msra.mxu0 0.0
    %636 = vmatprep.subr.mxu0 0.0
    %637 = vmatpush1.msra.mxu0 0.0
    %638 = vmatprep.subr.mxu0 0.0
    %639 = vmatpush1.msra.mxu0 0.0
    %640 = vmatprep.subr.mxu0 0.0
    %641 = vmatpush1.msra.mxu0 0.0
    %642 = vmatprep.subr.mxu0 0.0
    %643 = vmatpush1.msra.mxu0 0.0
    %644 = vmatprep.subr.mxu0 0.0
    %645 = vmatpush1.msra.mxu0 0.0
    %646 = vmatprep.subr.mxu0 0.0
    %647 = vmatpush1.msra.mxu0 %v186
    %648 = vmatprep.subr.mxu0 0.0
    %649 = vmatpush1.msra.mxu0 %v181
    %650 = vmatprep.subr.mxu0 0.0
    %651 = vmatpush2.msra.mxu0 0.0
    %652 = vmatprep.subr.mxu0 0.0
    %653 = vmatpush2.msra.mxu0 0.0
    %654 = vmatprep.subr.mxu0 0.0
    %655 = vmatpush2.msra.mxu0 0.0
    %656 = vmatprep.subr.mxu0 0.0
    %657 = vmatpush2.msra.mxu0 0.0
    %658 = vmatprep.subr.mxu0 0.0
    %659 = vmatpush2.msra.mxu0 0.0
    %660 = vmatprep.subr.mxu0 0.0
    %661 = vmatpush2.msra.mxu0 0.0
    %662 = vmatprep.subr.mxu0 0.0
    %663 = vmatpush2.msra.mxu0 0.0
    %664 = vmatprep.subr.mxu0 0.0
    %665 = vmatpush2.msra.mxu0 0.0
    %666 = vmatprep.subr.mxu0 0.0
    %667 = vmatpush2.msra.mxu0 0.0
    %668 = vmatprep.subr.mxu0 0.0
    %669 = vmatpush2.msra.mxu0 0.0
    %670 = vmatprep.subr.mxu0 0.0
    %671 = vmatpush2.msra.mxu0 0.0
    %672 = vmatprep.subr.mxu0 0.0
    %673 = vmatpush2.msra.mxu0 0.0
    %674 = vmatprep.subr.mxu0 0.0
    %675 = vmatpush2.msra.mxu0 0.0
    %676 = vmatprep.subr.mxu0 0.0
    %677 = vmatpush2.msra.mxu0 0.0
    %678 = vmatprep.subr.mxu0 0.0
    %679 = vmatpush2.msra.mxu0 0.0
    %680 = vmatprep.subr.mxu0 0.0
    %681 = vmatpush2.msra.mxu0 0.0
    %682 = vmatprep.mubr.f32.mxu0 0.0
    %683 = vmatmul.mubr.f32.gmra.mxu0 %v613
    %v684 = vpop.f32.mrf.mxu0
    %v685 = vadd.f32 0.0, %v684
    %v686 = vpop.f32.mrf.mxu0
    %687 = vmatprep.mubr.f32.mxu0 0.0
    %688 = vmatmul.mubr.f32.gmra.mxu0 %v616
    %v689 = vpop.f32.mrf.mxu0
    %v690 = vadd.f32 0.0, %v689
    %v691 = vpop.f32.mrf.mxu0
    %692 = vdwg.mxu0
    %s693 = scalar_lea.vmem [#allocation5], 256
    %v694 = vld [vmem:[%s693] sm:$0xff]
    %v695 = vld [vmem:[%s693 + $0x8] sm:$0xff]
    %v696 = vld [vmem:[%s693 + $0x10] sm:$0xff]
    %v697 = vld [vmem:[%s693 + $0x18] sm:$0xff]
    %v698 = vld [vmem:[%s693 + $0x20] sm:$0xff]
    %v699 = vld [vmem:[%s693 + $0x28] sm:$0xff]
    %v700 = vld [vmem:[%s693 + $0x30] sm:$0xff]
    %v701 = vld [vmem:[%s693 + $0x38] sm:$0xff]
    %v702 = vld [vmem:[%s693 + $0x40] sm:$0xff]
    %v703 = vld [vmem:[%s693 + $0x48] sm:$0xff]
    %v704 = vld [vmem:[%s693 + $0x50] sm:$0xff]
    %v705 = vld [vmem:[%s693 + $0x58] sm:$0xff]
    %v706 = vld [vmem:[%s693 + $0x60] sm:$0xff]
    %v707 = vld [vmem:[%s693 + $0x68] sm:$0xff]
    %v708 = vld [vmem:[%s693 + $0x70] sm:$0xff]
    %v709 = vld [vmem:[%s693 + $0x78] sm:$0xff]
    %710 = vmatprep.subr.mxu0 0.0
    %711 = vmatpush1.msra.mxu0 %v709
    %712 = vmatprep.subr.mxu0 0.0
    %713 = vmatpush1.msra.mxu0 %v708
    %714 = vmatprep.subr.mxu0 0.0
    %715 = vmatpush1.msra.mxu0 %v707
    %716 = vmatprep.subr.mxu0 0.0
    %717 = vmatpush1.msra.mxu0 %v706
    %718 = vmatprep.subr.mxu0 0.0
    %719 = vmatpush1.msra.mxu0 %v705
    %720 = vmatprep.subr.mxu0 0.0
    %721 = vmatpush1.msra.mxu0 %v704
    %722 = vmatprep.subr.mxu0 0.0
    %723 = vmatpush1.msra.mxu0 %v703
    %724 = vmatprep.subr.mxu0 0.0
    %725 = vmatpush1.msra.mxu0 %v702
    %726 = vmatprep.subr.mxu0 0.0
    %727 = vmatpush1.msra.mxu0 %v701
    %728 = vmatprep.subr.mxu0 0.0
    %729 = vmatpush1.msra.mxu0 %v700
    %730 = vmatprep.subr.mxu0 0.0
    %731 = vmatpush1.msra.mxu0 %v699
    %732 = vmatprep.subr.mxu0 0.0
    %733 = vmatpush1.msra.mxu0 %v698
    %734 = vmatprep.subr.mxu0 0.0
    %735 = vmatpush1.msra.mxu0 %v697
    %736 = vmatprep.subr.mxu0 0.0
    %737 = vmatpush1.msra.mxu0 %v696
    %738 = vmatprep.subr.mxu0 0.0
    %739 = vmatpush1.msra.mxu0 %v695
    %740 = vmatprep.subr.mxu0 0.0
    %741 = vmatpush1.msra.mxu0 %v694
    %742 = vmatprep.subr.mxu0 0.0
    %743 = vmatpush2.msra.mxu0 0.0
    %744 = vmatprep.subr.mxu0 0.0
    %745 = vmatpush2.msra.mxu0 0.0
    %746 = vmatprep.subr.mxu0 0.0
    %747 = vmatpush2.msra.mxu0 0.0
    %748 = vmatprep.subr.mxu0 0.0
    %749 = vmatpush2.msra.mxu0 0.0
    %750 = vmatprep.subr.mxu0 0.0
    %751 = vmatpush2.msra.mxu0 0.0
    %752 = vmatprep.subr.mxu0 0.0
    %753 = vmatpush2.msra.mxu0 0.0
    %754 = vmatprep.subr.mxu0 0.0
    %755 = vmatpush2.msra.mxu0 0.0
    %756 = vmatprep.subr.mxu0 0.0
    %757 = vmatpush2.msra.mxu0 0.0
    %758 = vmatprep.subr.mxu0 0.0
    %759 = vmatpush2.msra.mxu0 0.0
    %760 = vmatprep.subr.mxu0 0.0
    %761 = vmatpush2.msra.mxu0 0.0
    %762 = vmatprep.subr.mxu0 0.0
    %763 = vmatpush2.msra.mxu0 0.0
    %764 = vmatprep.subr.mxu0 0.0
    %765 = vmatpush2.msra.mxu0 0.0
    %766 = vmatprep.subr.mxu0 0.0
    %767 = vmatpush2.msra.mxu0 0.0
    %768 = vmatprep.subr.mxu0 0.0
    %769 = vmatpush2.msra.mxu0 0.0
    %770 = vmatprep.subr.mxu0 0.0
    %771 = vmatpush2.msra.mxu0 0.0
    %772 = vmatprep.subr.mxu0 0.0
    %773 = vmatpush2.msra.mxu0 0.0
    %774 = vmatprep.mubr.f32.mxu0 0.0
    %775 = vmatmul.mubr.f32.gmra.mxu0 %v685
    %v776 = vpop.f32.mrf.mxu0
    %v777 = vadd.f32 0.0, %v776
    %v778 = vpop.f32.mrf.mxu0
    %779 = vmatprep.mubr.f32.mxu0 0.0
    %780 = vmatmul.mubr.f32.gmra.mxu0 %v690
    %v781 = vpop.f32.mrf.mxu0
    %v782 = vadd.f32 0.0, %v781
    %v783 = vpop.f32.mrf.mxu0
    %784 = vdwg.mxu0
    %v785 = vadd.f32 %v590, %v777
    %v786 = vadd.f32 %v595, %v782
    %v787 = vadd.s32 %v214, 1
    %v788 = vadd.s32 %v215, 1
    %vm789 = vcmp.ge.s32.totalorder %v787, 0
    %vm790 = vcmp.ge.s32.totalorder %v788, 0
    %vm791 = vcmp.lt.s32.totalorder %v787, 8
    %vm792 = vcmp.lt.s32.totalorder %v788, 8
    %vm793 = vmand %vm789, %vm791
    %vm794 = vmand %vm790, %vm792
    %v795 = vadd.s32 %v190, 1
    %v796 = vadd.s32 %v191, 1
    %vm797 = vcmp.eq.s32.totalorder %v85, %v795
    %vm798 = vcmp.eq.s32.totalorder %v85, %v796
    %vm799 = vmand %vm793, %vm797
    %vm800 = vmand %vm794, %vm798
    %v801 = vsel %vm799, 1, 0
    %v802 = vsel %vm800, 1, 0
    %v803 = vcvt.s32.f32 %v801
    %v804 = vcvt.s32.f32 %v802
    %v806 = vsel %vm234, %v803, 0
    %v809 = vsel %vm234, %v804, 0
    %811 = vmatprep.subr.mxu0 0.0
    %812 = vmatpush1.msra.mxu0 0.0
    %813 = vmatprep.subr.mxu0 0.0
    %814 = vmatpush1.msra.mxu0 0.0
    %815 = vmatprep.subr.mxu0 0.0
    %816 = vmatpush1.msra.mxu0 0.0
    %817 = vmatprep.subr.mxu0 0.0
    %818 = vmatpush1.msra.mxu0 0.0
    %819 = vmatprep.subr.mxu0 0.0
    %820 = vmatpush1.msra.mxu0 0.0
    %821 = vmatprep.subr.mxu0 0.0
    %822 = vmatpush1.msra.mxu0 0.0
    %823 = vmatprep.subr.mxu0 0.0
    %824 = vmatpush1.msra.mxu0 0.0
    %825 = vmatprep.subr.mxu0 0.0
    %826 = vmatpush1.msra.mxu0 0.0
    %827 = vmatprep.subr.mxu0 0.0
    %828 = vmatpush1.msra.mxu0 0.0
    %829 = vmatprep.subr.mxu0 0.0
    %830 = vmatpush1.msra.mxu0 0.0
    %831 = vmatprep.subr.mxu0 0.0
    %832 = vmatpush1.msra.mxu0 0.0
    %833 = vmatprep.subr.mxu0 0.0
    %834 = vmatpush1.msra.mxu0 0.0
    %835 = vmatprep.subr.mxu0 0.0
    %836 = vmatpush1.msra.mxu0 0.0
    %837 = vmatprep.subr.mxu0 0.0
    %838 = vmatpush1.msra.mxu0 0.0
    %839 = vmatprep.subr.mxu0 0.0
    %840 = vmatpush1.msra.mxu0 %v186
    %841 = vmatprep.subr.mxu0 0.0
    %842 = vmatpush1.msra.mxu0 %v181
    %843 = vmatprep.subr.mxu0 0.0
    %844 = vmatpush2.msra.mxu0 0.0
    %845 = vmatprep.subr.mxu0 0.0
    %846 = vmatpush2.msra.mxu0 0.0
    %847 = vmatprep.subr.mxu0 0.0
    %848 = vmatpush2.msra.mxu0 0.0
    %849 = vmatprep.subr.mxu0 0.0
    %850 = vmatpush2.msra.mxu0 0.0
    %851 = vmatprep.subr.mxu0 0.0
    %852 = vmatpush2.msra.mxu0 0.0
    %853 = vmatprep.subr.mxu0 0.0
    %854 = vmatpush2.msra.mxu0 0.0
    %855 = vmatprep.subr.mxu0 0.0
    %856 = vmatpush2.msra.mxu0 0.0
    %857 = vmatprep.subr.mxu0 0.0
    %858 = vmatpush2.msra.mxu0 0.0
    %859 = vmatprep.subr.mxu0 0.0
    %860 = vmatpush2.msra.mxu0 0.0
    %861 = vmatprep.subr.mxu0 0.0
    %862 = vmatpush2.msra.mxu0 0.0
    %863 = vmatprep.subr.mxu0 0.0
    %864 = vmatpush2.msra.mxu0 0.0
    %865 = vmatprep.subr.mxu0 0.0
    %866 = vmatpush2.msra.mxu0 0.0
    %867 = vmatprep.subr.mxu0 0.0
    %868 = vmatpush2.msra.mxu0 0.0
    %869 = vmatprep.subr.mxu0 0.0
    %870 = vmatpush2.msra.mxu0 0.0
    %871 = vmatprep.subr.mxu0 0.0
    %872 = vmatpush2.msra.mxu0 0.0
    %873 = vmatprep.subr.mxu0 0.0
    %874 = vmatpush2.msra.mxu0 0.0
    %875 = vmatprep.mubr.f32.mxu0 0.0
    %876 = vmatmul.mubr.f32.gmra.mxu0 %v806
    %v877 = vpop.f32.mrf.mxu0
    %v878 = vadd.f32 0.0, %v877
    %v879 = vpop.f32.mrf.mxu0
    %880 = vmatprep.mubr.f32.mxu0 0.0
    %881 = vmatmul.mubr.f32.gmra.mxu0 %v809
    %v882 = vpop.f32.mrf.mxu0
    %v883 = vadd.f32 0.0, %v882
    %v884 = vpop.f32.mrf.mxu0
    %885 = vdwg.mxu0
    %s886 = scalar_lea.vmem [#allocation5], 384
    %v887 = vld [vmem:[%s886] sm:$0xff]
    %v888 = vld [vmem:[%s886 + $0x8] sm:$0xff]
    %v889 = vld [vmem:[%s886 + $0x10] sm:$0xff]
    %v890 = vld [vmem:[%s886 + $0x18] sm:$0xff]
    %v891 = vld [vmem:[%s886 + $0x20] sm:$0xff]
    %v892 = vld [vmem:[%s886 + $0x28] sm:$0xff]
    %v893 = vld [vmem:[%s886 + $0x30] sm:$0xff]
    %v894 = vld [vmem:[%s886 + $0x38] sm:$0xff]
    %v895 = vld [vmem:[%s886 + $0x40] sm:$0xff]
    %v896 = vld [vmem:[%s886 + $0x48] sm:$0xff]
    %v897 = vld [vmem:[%s886 + $0x50] sm:$0xff]
    %v898 = vld [vmem:[%s886 + $0x58] sm:$0xff]
    %v899 = vld [vmem:[%s886 + $0x60] sm:$0xff]
    %v900 = vld [vmem:[%s886 + $0x68] sm:$0xff]
    %v901 = vld [vmem:[%s886 + $0x70] sm:$0xff]
    %v902 = vld [vmem:[%s886 + $0x78] sm:$0xff]
    %903 = vmatprep.subr.mxu0 0.0
    %904 = vmatpush1.msra.mxu0 %v902
    %905 = vmatprep.subr.mxu0 0.0
    %906 = vmatpush1.msra.mxu0 %v901
    %907 = vmatprep.subr.mxu0 0.0
    %908 = vmatpush1.msra.mxu0 %v900
    %909 = vmatprep.subr.mxu0 0.0
    %910 = vmatpush1.msra.mxu0 %v899
    %911 = vmatprep.subr.mxu0 0.0
    %912 = vmatpush1.msra.mxu0 %v898
    %913 = vmatprep.subr.mxu0 0.0
    %914 = vmatpush1.msra.mxu0 %v897
    %915 = vmatprep.subr.mxu0 0.0
    %916 = vmatpush1.msra.mxu0 %v896
    %917 = vmatprep.subr.mxu0 0.0
    %918 = vmatpush1.msra.mxu0 %v895
    %919 = vmatprep.subr.mxu0 0.0
    %920 = vmatpush1.msra.mxu0 %v894
    %921 = vmatprep.subr.mxu0 0.0
    %922 = vmatpush1.msra.mxu0 %v893
    %923 = vmatprep.subr.mxu0 0.0
    %924 = vmatpush1.msra.mxu0 %v892
    %925 = vmatprep.subr.mxu0 0.0
    %926 = vmatpush1.msra.mxu0 %v891
    %927 = vmatprep.subr.mxu0 0.0
    %928 = vmatpush1.msra.mxu0 %v890
    %929 = vmatprep.subr.mxu0 0.0
    %930 = vmatpush1.msra.mxu0 %v889
    %931 = vmatprep.subr.mxu0 0.0
    %932 = vmatpush1.msra.mxu0 %v888
    %933 = vmatprep.subr.mxu0 0.0
    %934 = vmatpush1.msra.mxu0 %v887
    %935 = vmatprep.subr.mxu0 0.0
    %936 = vmatpush2.msra.mxu0 0.0
    %937 = vmatprep.subr.mxu0 0.0
    %938 = vmatpush2.msra.mxu0 0.0
    %939 = vmatprep.subr.mxu0 0.0
    %940 = vmatpush2.msra.mxu0 0.0
    %941 = vmatprep.subr.mxu0 0.0
    %942 = vmatpush2.msra.mxu0 0.0
    %943 = vmatprep.subr.mxu0 0.0
    %944 = vmatpush2.msra.mxu0 0.0
    %945 = vmatprep.subr.mxu0 0.0
    %946 = vmatpush2.msra.mxu0 0.0
    %947 = vmatprep.subr.mxu0 0.0
    %948 = vmatpush2.msra.mxu0 0.0
    %949 = vmatprep.subr.mxu0 0.0
    %950 = vmatpush2.msra.mxu0 0.0
    %951 = vmatprep.subr.mxu0 0.0
    %952 = vmatpush2.msra.mxu0 0.0
    %953 = vmatprep.subr.mxu0 0.0
    %954 = vmatpush2.msra.mxu0 0.0
    %955 = vmatprep.subr.mxu0 0.0
    %956 = vmatpush2.msra.mxu0 0.0
    %957 = vmatprep.subr.mxu0 0.0
    %958 = vmatpush2.msra.mxu0 0.0
    %959 = vmatprep.subr.mxu0 0.0
    %960 = vmatpush2.msra.mxu0 0.0
    %961 = vmatprep.subr.mxu0 0.0
    %962 = vmatpush2.msra.mxu0 0.0
    %963 = vmatprep.subr.mxu0 0.0
    %964 = vmatpush2.msra.mxu0 0.0
    %965 = vmatprep.subr.mxu0 0.0
    %966 = vmatpush2.msra.mxu0 0.0
    %967 = vmatprep.mubr.f32.mxu0 0.0
    %968 = vmatmul.mubr.f32.gmra.mxu0 %v878
    %v969 = vpop.f32.mrf.mxu0
    %v970 = vadd.f32 0.0, %v969
    %v971 = vpop.f32.mrf.mxu0
    %972 = vmatprep.mubr.f32.mxu0 0.0
    %973 = vmatmul.mubr.f32.gmra.mxu0 %v883
    %v974 = vpop.f32.mrf.mxu0
    %v975 = vadd.f32 0.0, %v974
    %v976 = vpop.f32.mrf.mxu0
    %977 = vdwg.mxu0
    %v978 = vadd.f32 %v785, %v970
    %v979 = vadd.f32 %v786, %v975
    %v980 = vadd.s32 %v214, 2
    %v981 = vadd.s32 %v215, 2
    %vm982 = vcmp.ge.s32.totalorder %v980, 0
    %vm983 = vcmp.ge.s32.totalorder %v981, 0
    %vm984 = vcmp.lt.s32.totalorder %v980, 8
    %vm985 = vcmp.lt.s32.totalorder %v981, 8
    %vm986 = vmand %vm982, %vm984
    %vm987 = vmand %vm983, %vm985
    %v988 = vadd.s32 %v190, 2
    %v989 = vadd.s32 %v191, 2
    %vm990 = vcmp.eq.s32.totalorder %v85, %v988
    %vm991 = vcmp.eq.s32.totalorder %v85, %v989
    %vm992 = vmand %vm986, %vm990
    %vm993 = vmand %vm987, %vm991
    %v994 = vsel %vm992, 1, 0
    %v995 = vsel %vm993, 1, 0
    %v996 = vcvt.s32.f32 %v994
    %v997 = vcvt.s32.f32 %v995
    %v999 = vsel %vm234, %v996, 0
    %v1002 = vsel %vm234, %v997, 0
    %1004 = vmatprep.subr.mxu0 0.0
    %1005 = vmatpush1.msra.mxu0 0.0
    %1006 = vmatprep.subr.mxu0 0.0
    %1007 = vmatpush1.msra.mxu0 0.0
    %1008 = vmatprep.subr.mxu0 0.0
    %1009 = vmatpush1.msra.mxu0 0.0
    %1010 = vmatprep.subr.mxu0 0.0
    %1011 = vmatpush1.msra.mxu0 0.0
    %1012 = vmatprep.subr.mxu0 0.0
    %1013 = vmatpush1.msra.mxu0 0.0
    %1014 = vmatprep.subr.mxu0 0.0
    %1015 = vmatpush1.msra.mxu0 0.0
    %1016 = vmatprep.subr.mxu0 0.0
    %1017 = vmatpush1.msra.mxu0 0.0
    %1018 = vmatprep.subr.mxu0 0.0
    %1019 = vmatpush1.msra.mxu0 0.0
    %1020 = vmatprep.subr.mxu0 0.0
    %1021 = vmatpush1.msra.mxu0 0.0
    %1022 = vmatprep.subr.mxu0 0.0
    %1023 = vmatpush1.msra.mxu0 0.0
    %1024 = vmatprep.subr.mxu0 0.0
    %1025 = vmatpush1.msra.mxu0 0.0
    %1026 = vmatprep.subr.mxu0 0.0
    %1027 = vmatpush1.msra.mxu0 0.0
    %1028 = vmatprep.subr.mxu0 0.0
    %1029 = vmatpush1.msra.mxu0 0.0
    %1030 = vmatprep.subr.mxu0 0.0
    %1031 = vmatpush1.msra.mxu0 0.0
    %1032 = vmatprep.subr.mxu0 0.0
    %1033 = vmatpush1.msra.mxu0 %v186
    %1034 = vmatprep.subr.mxu0 0.0
    %1035 = vmatpush1.msra.mxu0 %v181
    %1036 = vmatprep.subr.mxu0 0.0
    %1037 = vmatpush2.msra.mxu0 0.0
    %1038 = vmatprep.subr.mxu0 0.0
    %1039 = vmatpush2.msra.mxu0 0.0
    %1040 = vmatprep.subr.mxu0 0.0
    %1041 = vmatpush2.msra.mxu0 0.0
    %1042 = vmatprep.subr.mxu0 0.0
    %1043 = vmatpush2.msra.mxu0 0.0
    %1044 = vmatprep.subr.mxu0 0.0
    %1045 = vmatpush2.msra.mxu0 0.0
    %1046 = vmatprep.subr.mxu0 0.0
    %1047 = vmatpush2.msra.mxu0 0.0
    %1048 = vmatprep.subr.mxu0 0.0
    %1049 = vmatpush2.msra.mxu0 0.0
    %1050 = vmatprep.subr.mxu0 0.0
    %1051 = vmatpush2.msra.mxu0 0.0
    %1052 = vmatprep.subr.mxu0 0.0
    %1053 = vmatpush2.msra.mxu0 0.0
    %1054 = vmatprep.subr.mxu0 0.0
    %1055 = vmatpush2.msra.mxu0 0.0
    %1056 = vmatprep.subr.mxu0 0.0
    %1057 = vmatpush2.msra.mxu0 0.0
    %1058 = vmatprep.subr.mxu0 0.0
    %1059 = vmatpush2.msra.mxu0 0.0
    %1060 = vmatprep.subr.mxu0 0.0
    %1061 = vmatpush2.msra.mxu0 0.0
    %1062 = vmatprep.subr.mxu0 0.0
    %1063 = vmatpush2.msra.mxu0 0.0
    %1064 = vmatprep.subr.mxu0 0.0
    %1065 = vmatpush2.msra.mxu0 0.0
    %1066 = vmatprep.subr.mxu0 0.0
    %1067 = vmatpush2.msra.mxu0 0.0
    %1068 = vmatprep.mubr.f32.mxu0 0.0
    %1069 = vmatmul.mubr.f32.gmra.mxu0 %v999
    %v1070 = vpop.f32.mrf.mxu0
    %v1071 = vadd.f32 0.0, %v1070
    %v1072 = vpop.f32.mrf.mxu0
    %1073 = vmatprep.mubr.f32.mxu0 0.0
    %1074 = vmatmul.mubr.f32.gmra.mxu0 %v1002
    %v1075 = vpop.f32.mrf.mxu0
    %v1076 = vadd.f32 0.0, %v1075
    %v1077 = vpop.f32.mrf.mxu0
    %1078 = vdwg.mxu0
    %s1079 = scalar_lea.vmem [#allocation5], 512
    %v1080 = vld [vmem:[%s1079] sm:$0xff]
    %v1081 = vld [vmem:[%s1079 + $0x8] sm:$0xff]
    %v1082 = vld [vmem:[%s1079 + $0x10] sm:$0xff]
    %v1083 = vld [vmem:[%s1079 + $0x18] sm:$0xff]
    %v1084 = vld [vmem:[%s1079 + $0x20] sm:$0xff]
    %v1085 = vld [vmem:[%s1079 + $0x28] sm:$0xff]
    %v1086 = vld [vmem:[%s1079 + $0x30] sm:$0xff]
    %v1087 = vld [vmem:[%s1079 + $0x38] sm:$0xff]
    %v1088 = vld [vmem:[%s1079 + $0x40] sm:$0xff]
    %v1089 = vld [vmem:[%s1079 + $0x48] sm:$0xff]
    %v1090 = vld [vmem:[%s1079 + $0x50] sm:$0xff]
    %v1091 = vld [vmem:[%s1079 + $0x58] sm:$0xff]
    %v1092 = vld [vmem:[%s1079 + $0x60] sm:$0xff]
    %v1093 = vld [vmem:[%s1079 + $0x68] sm:$0xff]
    %v1094 = vld [vmem:[%s1079 + $0x70] sm:$0xff]
    %v1095 = vld [vmem:[%s1079 + $0x78] sm:$0xff]
    %1096 = vmatprep.subr.mxu0 0.0
    %1097 = vmatpush1.msra.mxu0 %v1095
    %1098 = vmatprep.subr.mxu0 0.0
    %1099 = vmatpush1.msra.mxu0 %v1094
    %1100 = vmatprep.subr.mxu0 0.0
    %1101 = vmatpush1.msra.mxu0 %v1093
    %1102 = vmatprep.subr.mxu0 0.0
    %1103 = vmatpush1.msra.mxu0 %v1092
    %1104 = vmatprep.subr.mxu0 0.0
    %1105 = vmatpush1.msra.mxu0 %v1091
    %1106 = vmatprep.subr.mxu0 0.0
    %1107 = vmatpush1.msra.mxu0 %v1090
    %1108 = vmatprep.subr.mxu0 0.0
    %1109 = vmatpush1.msra.mxu0 %v1089
    %1110 = vmatprep.subr.mxu0 0.0
    %1111 = vmatpush1.msra.mxu0 %v1088
    %1112 = vmatprep.subr.mxu0 0.0
    %1113 = vmatpush1.msra.mxu0 %v1087
    %1114 = vmatprep.subr.mxu0 0.0
    %1115 = vmatpush1.msra.mxu0 %v1086
    %1116 = vmatprep.subr.mxu0 0.0
    %1117 = vmatpush1.msra.mxu0 %v1085
    %1118 = vmatprep.subr.mxu0 0.0
    %1119 = vmatpush1.msra.mxu0 %v1084
    %1120 = vmatprep.subr.mxu0 0.0
    %1121 = vmatpush1.msra.mxu0 %v1083
    %1122 = vmatprep.subr.mxu0 0.0
    %1123 = vmatpush1.msra.mxu0 %v1082
    %1124 = vmatprep.subr.mxu0 0.0
    %1125 = vmatpush1.msra.mxu0 %v1081
    %1126 = vmatprep.subr.mxu0 0.0
    %1127 = vmatpush1.msra.mxu0 %v1080
    %1128 = vmatprep.subr.mxu0 0.0
    %1129 = vmatpush2.msra.mxu0 0.0
    %1130 = vmatprep.subr.mxu0 0.0
    %1131 = vmatpush2.msra.mxu0 0.0
    %1132 = vmatprep.subr.mxu0 0.0
    %1133 = vmatpush2.msra.mxu0 0.0
    %1134 = vmatprep.subr.mxu0 0.0
    %1135 = vmatpush2.msra.mxu0 0.0
    %1136 = vmatprep.subr.mxu0 0.0
    %1137 = vmatpush2.msra.mxu0 0.0
    %1138 = vmatprep.subr.mxu0 0.0
    %1139 = vmatpush2.msra.mxu0 0.0
    %1140 = vmatprep.subr.mxu0 0.0
    %1141 = vmatpush2.msra.mxu0 0.0
    %1142 = vmatprep.subr.mxu0 0.0
    %1143 = vmatpush2.msra.mxu0 0.0
    %1144 = vmatprep.subr.mxu0 0.0
    %1145 = vmatpush2.msra.mxu0 0.0
    %1146 = vmatprep.subr.mxu0 0.0
    %1147 = vmatpush2.msra.mxu0 0.0
    %1148 = vmatprep.subr.mxu0 0.0
    %1149 = vmatpush2.msra.mxu0 0.0
    %1150 = vmatprep.subr.mxu0 0.0
    %1151 = vmatpush2.msra.mxu0 0.0
    %1152 = vmatprep.subr.mxu0 0.0
    %1153 = vmatpush2.msra.mxu0 0.0
    %1154 = vmatprep.subr.mxu0 0.0
    %1155 = vmatpush2.msra.mxu0 0.0
    %1156 = vmatprep.subr.mxu0 0.0
    %1157 = vmatpush2.msra.mxu0 0.0
    %1158 = vmatprep.subr.mxu0 0.0
    %1159 = vmatpush2.msra.mxu0 0.0
    %1160 = vmatprep.mubr.f32.mxu0 0.0
    %1161 = vmatmul.mubr.f32.gmra.mxu0 %v1071
    %v1162 = vpop.f32.mrf.mxu0
    %v1163 = vadd.f32 0.0, %v1162
    %v1164 = vpop.f32.mrf.mxu0
    %1165 = vmatprep.mubr.f32.mxu0 0.0
    %1166 = vmatmul.mubr.f32.gmra.mxu0 %v1076
    %v1167 = vpop.f32.mrf.mxu0
    %v1168 = vadd.f32 0.0, %v1167
    %v1169 = vpop.f32.mrf.mxu0
    %1170 = vdwg.mxu0
    %v1171 = vadd.f32 %v978, %v1163
    %v1172 = vadd.f32 %v979, %v1168
    %v1173 = vrot.slane %v1171, 4
    %v1174 = vmax.f32 %v1171, %v1173
    %v1175 = vrot.slane %v1174, 2
    %v1176 = vmax.f32 %v1174, %v1175
    %v1177 = vrot.slane %v1176, 1
    %v1178 = vmax.f32 %v1176, %v1177
    %v1179 = vrot.slane %v1172, 4
    %v1180 = vmax.f32 %v1172, %v1179
    %v1181 = vrot.slane %v1180, 2
    %v1182 = vmax.f32 %v1180, %v1181
    %v1183 = vrot.slane %v1182, 1
    %v1184 = vmax.f32 %v1182, %v1183
    %v1185 = vld [vmem:[#allocation7] sm:$0xff]
    %v1186 = vld [vmem:[#allocation7 + $0x8] sm:$0xff]
    %v1187 = vld [vmem:[#allocation7 + $0x10] sm:$0xff]
    %v1188 = vld [vmem:[#allocation7 + $0x18] sm:$0xff]
    %v1189 = vld [vmem:[#allocation7 + $0x20] sm:$0xff]
    %v1190 = vld [vmem:[#allocation7 + $0x28] sm:$0xff]
    %v1191 = vld [vmem:[#allocation7 + $0x30] sm:$0xff]
    %v1192 = vld [vmem:[#allocation7 + $0x38] sm:$0xff]
    %v1193 = vld [vmem:[#allocation7 + $0x40] sm:$0xff]
    %v1194 = vld [vmem:[#allocation7 + $0x48] sm:$0xff]
    %v1195 = vld [vmem:[#allocation7 + $0x50] sm:$0xff]
    %v1196 = vld [vmem:[#allocation7 + $0x58] sm:$0xff]
    %v1197 = vld [vmem:[#allocation7 + $0x60] sm:$0xff]
    %v1198 = vld [vmem:[#allocation7 + $0x68] sm:$0xff]
    %v1199 = vld [vmem:[#allocation7 + $0x70] sm:$0xff]
    %v1200 = vld [vmem:[#allocation7 + $0x78] sm:$0xff]
    %v1201 = vld [vmem:[%s4] sm:$0x1]
    %v1203 = vlaneseq
    %v1204 = vshrl.u32 %v1203, 7
    %v1205 = vsub.s32 0, %v1204
    %v1206 = vrot.slane %v1201, %v1205
    %vm1210 = vcmask 1041409
    %v1211 = vsel %vm1210, %v1184, %v1178
    %1213 = vmatprep.subr.mxu0 0.0
    %1214 = vmatpush1.msra.mxu0 %v1200
    %1215 = vmatprep.subr.mxu0 0.0
    %1216 = vmatpush1.msra.mxu0 %v1199
    %1217 = vmatprep.subr.mxu0 0.0
    %1218 = vmatpush1.msra.mxu0 %v1198
    %1219 = vmatprep.subr.mxu0 0.0
    %1220 = vmatpush1.msra.mxu0 %v1197
    %1221 = vmatprep.subr.mxu0 0.0
    %1222 = vmatpush1.msra.mxu0 %v1196
    %1223 = vmatprep.subr.mxu0 0.0
    %1224 = vmatpush1.msra.mxu0 %v1195
    %1225 = vmatprep.subr.mxu0 0.0
    %1226 = vmatpush1.msra.mxu0 %v1194
    %1227 = vmatprep.subr.mxu0 0.0
    %1228 = vmatpush1.msra.mxu0 %v1193
    %1229 = vmatprep.subr.mxu0 0.0
    %1230 = vmatpush1.msra.mxu0 %v1192
    %1231 = vmatprep.subr.mxu0 0.0
    %1232 = vmatpush1.msra.mxu0 %v1191
    %1233 = vmatprep.subr.mxu0 0.0
    %1234 = vmatpush1.msra.mxu0 %v1190
    %1235 = vmatprep.subr.mxu0 0.0
    %1236 = vmatpush1.msra.mxu0 %v1189
    %1237 = vmatprep.subr.mxu0 0.0
    %1238 = vmatpush1.msra.mxu0 %v1188
    %1239 = vmatprep.subr.mxu0 0.0
    %1240 = vmatpush1.msra.mxu0 %v1187
    %1241 = vmatprep.subr.mxu0 0.0
    %1242 = vmatpush1.msra.mxu0 %v1186
    %1243 = vmatprep.subr.mxu0 0.0
    %1244 = vmatpush1.msra.mxu0 %v1185
    %1245 = vmatprep.subr.mxu0 0.0
    %1246 = vmatpush2.msra.mxu0 0.0
    %1247 = vmatprep.subr.mxu0 0.0
    %1248 = vmatpush2.msra.mxu0 0.0
    %1249 = vmatprep.subr.mxu0 0.0
    %1250 = vmatpush2.msra.mxu0 0.0
    %1251 = vmatprep.subr.mxu0 0.0
    %1252 = vmatpush2.msra.mxu0 0.0
    %1253 = vmatprep.subr.mxu0 0.0
    %1254 = vmatpush2.msra.mxu0 0.0
    %1255 = vmatprep.subr.mxu0 0.0
    %1256 = vmatpush2.msra.mxu0 0.0
    %1257 = vmatprep.subr.mxu0 0.0
    %1258 = vmatpush2.msra.mxu0 0.0
    %1259 = vmatprep.subr.mxu0 0.0
    %1260 = vmatpush2.msra.mxu0 0.0
    %1261 = vmatprep.subr.mxu0 0.0
    %1262 = vmatpush2.msra.mxu0 0.0
    %1263 = vmatprep.subr.mxu0 0.0
    %1264 = vmatpush2.msra.mxu0 0.0
    %1265 = vmatprep.subr.mxu0 0.0
    %1266 = vmatpush2.msra.mxu0 0.0
    %1267 = vmatprep.subr.mxu0 0.0
    %1268 = vmatpush2.msra.mxu0 0.0
    %1269 = vmatprep.subr.mxu0 0.0
    %1270 = vmatpush2.msra.mxu0 0.0
    %1271 = vmatprep.subr.mxu0 0.0
    %1272 = vmatpush2.msra.mxu0 0.0
    %1273 = vmatprep.subr.mxu0 0.0
    %1274 = vmatpush2.msra.mxu0 0.0
    %1275 = vmatprep.subr.mxu0 0.0
    %1276 = vmatpush2.msra.mxu0 0.0
    %1277 = vmatprep.mubr.f32.mxu0 0.0
    %1278 = vmatmul.mubr.f32.gmra.mxu0 %v1211
    %v1279 = vpop.f32.mrf.mxu0
    %v1280 = vadd.f32 %v1206, %v1279
    %v1281 = vpop.f32.mrf.mxu0
    %1282 = vdwg.mxu0
    %v1283 = vmul.f32 %v1280, 0.5
    %v1284 = vmul.f32 %v1280, 0.70710677
    %v1285 = verf.f32.pop %v1284
    %v1286 = vadd.f32 %v1285, 1.0
    %v1287 = vmul.f32 %v1283, %v1286
    %v1288 = vld [vmem:[#allocation8] sm:$0xff]
    %v1289 = vld [vmem:[#allocation8 + $0x8] sm:$0xff]
    %v1290 = vld [vmem:[#allocation8 + $0x10] sm:$0xff]
    %v1291 = vld [vmem:[#allocation8 + $0x18] sm:$0xff]
    %v1292 = vld [vmem:[#allocation8 + $0x20] sm:$0xff]
    %v1293 = vld [vmem:[#allocation8 + $0x28] sm:$0xff]
    %v1294 = vld [vmem:[#allocation8 + $0x30] sm:$0xff]
    %v1295 = vld [vmem:[#allocation8 + $0x38] sm:$0xff]
    %v1296 = vld [vmem:[#allocation8 + $0x40] sm:$0xff]
    %v1297 = vld [vmem:[#allocation8 + $0x48] sm:$0xff]
    %v1298 = vld [vmem:[#allocation8 + $0x50] sm:$0xff]
    %v1299 = vld [vmem:[#allocation8 + $0x58] sm:$0xff]
    %v1300 = vld [vmem:[#allocation8 + $0x60] sm:$0xff]
    %v1301 = vld [vmem:[#allocation8 + $0x68] sm:$0xff]
    %v1302 = vld [vmem:[#allocation8 + $0x70] sm:$0xff]
    %v1303 = vld [vmem:[#allocation8 + $0x78] sm:$0xff]
    %v1304 = vld [vmem:[%s6] sm:$0x1]
    %v1306 = vlaneseq
    %v1307 = vshrl.u32 %v1306, 7
    %v1308 = vsub.s32 0, %v1307
    %v1309 = vrot.slane %v1304, %v1308
    %1311 = vmatprep.subr.mxu0 0.0
    %1312 = vmatpush1.msra.mxu0 %v1303
    %1313 = vmatprep.subr.mxu0 0.0
    %1314 = vmatpush1.msra.mxu0 %v1302
    %1315 = vmatprep.subr.mxu0 0.0
    %1316 = vmatpush1.msra.mxu0 %v1301
    %1317 = vmatprep.subr.mxu0 0.0
    %1318 = vmatpush1.msra.mxu0 %v1300
    %1319 = vmatprep.subr.mxu0 0.0
    %1320 = vmatpush1.msra.mxu0 %v1299
    %1321 = vmatprep.subr.mxu0 0.0
    %1322 = vmatpush1.msra.mxu0 %v1298
    %1323 = vmatprep.subr.mxu0 0.0
    %1324 = vmatpush1.msra.mxu0 %v1297
    %1325 = vmatprep.subr.mxu0 0.0
    %1326 = vmatpush1.msra.mxu0 %v1296
    %1327 = vmatprep.subr.mxu0 0.0
    %1328 = vmatpush1.msra.mxu0 %v1295
    %1329 = vmatprep.subr.mxu0 0.0
    %1330 = vmatpush1.msra.mxu0 %v1294
    %1331 = vmatprep.subr.mxu0 0.0
    %1332 = vmatpush1.msra.mxu0 %v1293
    %1333 = vmatprep.subr.mxu0 0.0
    %1334 = vmatpush1.msra.mxu0 %v1292
    %1335 = vmatprep.subr.mxu0 0.0
    %1336 = vmatpush1.msra.mxu0 %v1291
    %1337 = vmatprep.subr.mxu0 0.0
    %1338 = vmatpush1.msra.mxu0 %v1290
    %1339 = vmatprep.subr.mxu0 0.0
    %1340 = vmatpush1.msra.mxu0 %v1289
    %1341 = vmatprep.subr.mxu0 0.0
    %1342 = vmatpush1.msra.mxu0 %v1288
    %1343 = vmatprep.subr.mxu0 0.0
    %1344 = vmatpush2.msra.mxu0 0.0
    %1345 = vmatprep.subr.mxu0 0.0
    %1346 = vmatpush2.msra.mxu0 0.0
    %1347 = vmatprep.subr.mxu0 0.0
    %1348 = vmatpush2.msra.mxu0 0.0
    %1349 = vmatprep.subr.mxu0 0.0
    %1350 = vmatpush2.msra.mxu0 0.0
    %1351 = vmatprep.subr.mxu0 0.0
    %1352 = vmatpush2.msra.mxu0 0.0
    %1353 = vmatprep.subr.mxu0 0.0
    %1354 = vmatpush2.msra.mxu0 0.0
    %1355 = vmatprep.subr.mxu0 0.0
    %1356 = vmatpush2.msra.mxu0 0.0
    %1357 = vmatprep.subr.mxu0 0.0
    %1358 = vmatpush2.msra.mxu0 0.0
    %1359 = vmatprep.subr.mxu0 0.0
    %1360 = vmatpush2.msra.mxu0 0.0
    %1361 = vmatprep.subr.mxu0 0.0
    %1362 = vmatpush2.msra.mxu0 0.0
    %1363 = vmatprep.subr.mxu0 0.0
    %1364 = vmatpush2.msra.mxu0 0.0
    %1365 = vmatprep.subr.mxu0 0.0
    %1366 = vmatpush2.msra.mxu0 0.0
    %1367 = vmatprep.subr.mxu0 0.0
    %1368 = vmatpush2.msra.mxu0 0.0
    %1369 = vmatprep.subr.mxu0 0.0
    %1370 = vmatpush2.msra.mxu0 0.0
    %1371 = vmatprep.subr.mxu0 0.0
    %1372 = vmatpush2.msra.mxu0 0.0
    %1373 = vmatprep.subr.mxu0 0.0
    %1374 = vmatpush2.msra.mxu0 0.0
    %1375 = vmatprep.mubr.f32.mxu0 0.0
    %1376 = vmatmul.mubr.f32.gmra.mxu0 %v1287
    %v1377 = vpop.f32.mrf.mxu0
    %v1378 = vadd.f32 %v1309, %v1377
    %v1379 = vpop.f32.mrf.mxu0
    %1380 = vdwg.mxu0
    %1381 = vst [vmem:[#allocation10] sm:$0x3] %v1378
    // Predicated region
    $region46: #{classification_forward.1} parent=1 // pred_check
      _
    $region47: #{classification_forward.1} parent=1 // pred_check_branch
      %1383 = sbr.rel (0) target = $region49
    $region48: #{classification_forward.1} parent=1 // pred_region
      %s1385 = ssub.s32 32, 32
      %1386 = vsyncadd [#allocation4], %s1385
      %s1388 = sshll.u32 [#allocation10], 4
      %s1389 = int_to_ptr.vmem [resolvable:$true] %s1388
      %1391 = dma.vmem_to_hbm [thread:$0]  %s1389, 32, %s7, [#allocation4]
    $region49: #{classification_forward.1} parent=1 // pred_fallthru
      _
    // Predicated region
    $region50: #{classification_forward.1} parent=1 // pred_check
      _
    $region51: #{classification_forward.1} parent=1 // pred_check_branch
      %1393 = sbr.rel (0) target = $region53
    $region52: #{classification_forward.1} parent=1 // pred_region
      %1394 = dma.done [#allocation4], 32
    $region53: #{classification_forward.1} parent=1 // pred_fallthru
      _
    %1395 = vsyncpa [#allocation3], 1
    %1396 = vsyncpa [#allocation6], 1
    %1397 = vsyncpa [#allocation9], 1
    %1398 = vsyncpa [#allocation4], 1

</llo_original>
